<compile_context>
chip_gen: v7x
topology: tpu7x:2x2x1
jax: 0.10.0
libtpu: 0.0.40
codegen_flags: <defaults>
</compile_context>

<pallas_src>
import jax
import jax.numpy as jnp
from jax import lax
from jax.experimental import pallas as pl
from jax.experimental.pallas import tpu as pltpu


def _round_up(x, m):
    return ((x + m - 1) // m) * m


def bilstm_parser_kernel(
    x2_ref,        # (T, 4E)   [x_t | x_{T-1-t}] per row
    w_in_ref,      # (4E, 8H)  fused input-projection weight (both directions)
    b_in_ref,      # (1, 8H)   fused bias (b_ih + b_hh, both directions)
    w_rec_ref,     # (2H, 8H)  block recurrent weight for h = [h_f | h_b]
    w_out_f_ref,   # (H, Nout) output weight, forward-hidden rows
    w_out_b_ref,   # (H, Nout) output weight, backward-hidden rows
    b_out_ref,     # (1, Nout) fused output bias ([b_head | b_dep | 0...])
    out_ref,       # (T, Nout) fused [head | dep | pad] logits
    gates_scr,     # (T, 8H)   scratch: fused input-gate projections
    hid_f_scr,     # (T, H)    scratch: forward hidden states (time order)
    hid_b_scr,     # (T, H)    scratch: backward hidden states (time order)
):
    T = x2_ref.shape[0]
    H = hid_f_scr.shape[1]
    H2 = 2 * H   # fused state width

    # ---- one MXU pass for ALL input projections of BOTH directions ----
    gates_scr[...] = (
        jnp.dot(x2_ref[...], w_in_ref[...], preferred_element_type=jnp.float32)
        + b_in_ref[...]
    )

    w_rec = w_rec_ref[...]   # hoisted out of the recurrence loop

    # Fused gate column layout (each block H wide):
    #   [ i_f, i_b, f_f, f_b, o_f, o_b, g_f, g_b ]
    # -> sigmoid gates (i,f,o) are the contiguous first 6H columns,
    #    tanh gate (g) is the contiguous last 2H columns, and every gate slice
    #    of width 2H lines up with h = [h_f|h_b], c = [c_f|c_b].
    def step(s, carry):
        h, c = carry                                   # (1, 2H) each
        gx = gates_scr[pl.ds(s, 1), :]                 # (1, 8H)
        pre = gx + jnp.dot(h, w_rec, preferred_element_type=jnp.float32)
        sig = jax.nn.sigmoid(pre[:, 0:3 * H2])         # one EUP push, 6H wide
        g = jnp.tanh(pre[:, 3 * H2:4 * H2])            # one EUP push, 2H wide
        i = sig[:, 0:H2]
        f = sig[:, H2:2 * H2]
        o = sig[:, 2 * H2:3 * H2]
        c_new = f * c + i * g
        h_new = o * jnp.tanh(c_new)
        # forward hidden belongs to time s; backward hidden to time T-1-s.
        hid_f_scr[pl.ds(s, 1), :] = h_new[:, 0:H]
        hid_b_scr[pl.ds(T - 1 - s, 1), :] = h_new[:, H:H2]
        return (h_new, c_new)

    h0 = jnp.zeros((1, H2), jnp.float32)
    c0 = jnp.zeros((1, H2), jnp.float32)
    lax.fori_loop(0, T, step, (h0, c0), unroll=True)

    # ---- fused output heads: one lane-dense (T, Nout) matmul/store ----
    out_ref[...] = (
        jnp.dot(hid_f_scr[...], w_out_f_ref[...], preferred_element_type=jnp.float32)
        + jnp.dot(hid_b_scr[...], w_out_b_ref[...], preferred_element_type=jnp.float32)
        + b_out_ref[...]
    )


# PyTorch LSTM gate order is [i, f, g, o]; fused kernel layout is [i, f, o, g]
# (sigmoid gates first, tanh gate last), direction-minor within each block.
_FUSED_BLOCK_OF_PT_GATE = (0, 1, 3, 2)   # i->0, f->1, g->3, o->2


def _place_gate_blocks(w_dir, d, H):
    """Scatter a (rows, 4H) PyTorch-order [i,f,g,o] weight into the fused
    gate-major / direction-minor layout [i_f,i_b, f_f,f_b, o_f,o_b, g_f,g_b].

    d=0 -> forward-direction slots, d=1 -> backward slots.  Returns (rows, 8H).
    """
    rows = w_dir.shape[0]
    out = jnp.zeros((rows, 8 * H), jnp.float32)
    for pt_gate in range(4):
        src = w_dir[:, pt_gate * H:(pt_gate + 1) * H]
        col = (2 * _FUSED_BLOCK_OF_PT_GATE[pt_gate] + d) * H
        out = out.at[:, col:col + H].set(src)
    return out


def bilstm_dependency_parser(words, pos, params):
    """Forward pass matching BiLSTMDependencyParser.forward for 1-D inputs."""
    # ---- embedding lookups (gather glue; stays in plain JAX) ----
    we = params["word_emb"][words]                                   # (T, E)
    pe = params["pos_emb"][pos]                                      # (T, E)
    x = jnp.concatenate([we, pe], axis=-1).astype(jnp.float32)       # (T, 2E)

    T = x.shape[0]
    E2 = x.shape[1]                       # 2E
    H = params["whh_f"].shape[0]
    D = params["w_dep"].shape[1]
    n_out = _round_up(1 + D, 128)         # fused [head|dep] lane-dense width

    # ---- fused inputs: [x_t | x_{T-1-t}] so both directions share row t ----
    x2 = jnp.concatenate([x, x[::-1]], axis=1)                       # (T, 4E)

    # ---- fused weights (static re-packing, done in the wrapper) ----
    # Input projection: rows 0:2E drive the forward slots, rows 2E:4E drive the
    # backward slots (fed by the time-reversed copy of x).
    w_in = jnp.concatenate(
        [_place_gate_blocks(params["wih_f"], 0, H),
         _place_gate_blocks(params["wih_b"], 1, H)], axis=0)         # (4E, 8H)
    b_in = (_place_gate_blocks(params["b_f"], 0, H)
            + _place_gate_blocks(params["b_b"], 1, H))               # (1, 8H)
    # Recurrent weight for fused h = [h_f | h_b] (block structure keeps the two
    # directions independent).
    w_rec = jnp.concatenate(
        [_place_gate_blocks(params["whh_f"], 0, H),
         _place_gate_blocks(params["whh_b"], 1, H)], axis=0)         # (2H, 8H)
    # Fused output head: columns [head(1) | dep(D) | zero-pad].
    w_out = jnp.zeros((2 * H, n_out), jnp.float32)
    w_out = w_out.at[:, 0:1].set(params["w_head"])
    w_out = w_out.at[:, 1:1 + D].set(params["w_dep"])
    w_out_f = w_out[0:H, :]                                          # (H, Nout)
    w_out_b = w_out[H:2 * H, :]                                      # (H, Nout)
    b_out = jnp.zeros((1, n_out), jnp.float32)
    b_out = b_out.at[:, 0:1].set(params["b_head"])
    b_out = b_out.at[:, 1:1 + D].set(params["b_dep"])

    vmem = pl.BlockSpec(memory_space=pltpu.MemorySpace.VMEM)
    kernel_inputs = (x2, w_in, b_in, w_rec, w_out_f, w_out_b, b_out)

    flops = (2 * T * (2 * E2) * (8 * H)       # fused input projections
             + 2 * T * (2 * H) * (8 * H)      # fused recurrent matmuls
             + 2 * 2 * T * H * n_out          # output heads
             + 8 * T * 2 * H)                 # elementwise cell math
    transcendentals = T * (6 * H + 2 * H + 2 * H) * 2   # sigmoid(6H)+tanh(2H)+tanh(c)
    bytes_accessed = 4 * (x2.size + w_in.size + b_in.size + w_rec.size
                          + w_out_f.size + w_out_b.size + b_out.size + T * n_out)

    fused_out = pl.pallas_call(
        bilstm_parser_kernel,
        out_shape=jax.ShapeDtypeStruct((T, n_out), jnp.float32),
        in_specs=[vmem] * len(kernel_inputs),
        out_specs=vmem,
        scratch_shapes=[
            pltpu.VMEM((T, 8 * H), jnp.float32),   # fused input-gate projections
            pltpu.VMEM((T, H), jnp.float32),       # forward hidden states
            pltpu.VMEM((T, H), jnp.float32),       # backward hidden states
        ],
        compiler_params=pltpu.CompilerParams(vmem_limit_bytes=32 * 1024 * 1024),
        cost_estimate=pl.CostEstimate(
            flops=int(flops),
            transcendentals=int(transcendentals),
            bytes_accessed=int(bytes_accessed),
        ),
    )(*kernel_inputs)

    head_logits = fused_out[:, 0:1]       # (T, 1)
    dep_logits = fused_out[:, 1:1 + D]    # (T, D)
    return head_logits, dep_logits


# ---------------- pure-JAX reference (for correctness check) ----------------
def reference_forward(words, pos, params):
    we = params["word_emb"][words]
    pe = params["pos_emb"][pos]
    x = jnp.concatenate([we, pe], axis=-1).astype(jnp.float32)       # (T, 2E)
    H = params["whh_f"].shape[0]

    def run_dir(xs, wih, whh, b):
        b0 = b[0]

        def cell(carry, xt):
            h, c = carry
            gates = xt @ wih + h @ whh + b0
            i = jax.nn.sigmoid(gates[0:H])
            f = jax.nn.sigmoid(gates[H:2 * H])
            g = jnp.tanh(gates[2 * H:3 * H])
            o = jax.nn.sigmoid(gates[3 * H:4 * H])
            c_new = f * c + i * g
            h_new = o * jnp.tanh(c_new)
            return (h_new, c_new), h_new

        init = (jnp.zeros((H,), jnp.float32), jnp.zeros((H,), jnp.float32))
        _, hs = lax.scan(cell, init, xs)
        return hs

    h_f = run_dir(x, params["wih_f"], params["whh_f"], params["b_f"])
    h_b = run_dir(x[::-1], params["wih_b"], params["whh_b"], params["b_b"])[::-1]
    lstm_out = jnp.concatenate([h_f, h_b], axis=1)                   # (T, 2H)
    head = lstm_out @ params["w_head"] + params["b_head"][0]
    dep = lstm_out @ params["w_dep"] + params["b_dep"][0]
    return head, dep


if __name__ == "__main__":
    # Small, deterministic configuration.
    word_vocab_size, pos_vocab_size, dep_vocab_size = 50, 20, 12
    embedding_dim, hidden_dim, seq_len = 16, 32, 8
    E, H, T, D = embedding_dim, hidden_dim, seq_len, dep_vocab_size

    key = jax.random.PRNGKey(0)
    keys = jax.random.split(key, 16)

    def u(k, shape, scale):
        return jax.random.uniform(k, shape, jnp.float32, -scale, scale)

    k_lstm = 1.0 / (H ** 0.5)
    k_lin = 1.0 / ((2 * H) ** 0.5)

    params = {
        "word_emb": jax.random.normal(keys[0], (word_vocab_size, E), jnp.float32),
        "pos_emb": jax.random.normal(keys[1], (pos_vocab_size, E), jnp.float32),
        # LSTM forward direction (weights stored transposed: (in, 4H), gates [i,f,g,o])
        "wih_f": u(keys[2], (2 * E, 4 * H), k_lstm),
        "whh_f": u(keys[3], (H, 4 * H), k_lstm),
        "b_f":   u(keys[4], (1, 4 * H), k_lstm),       # b_ih + b_hh combined
        # LSTM backward direction
        "wih_b": u(keys[5], (2 * E, 4 * H), k_lstm),
        "whh_b": u(keys[6], (H, 4 * H), k_lstm),
        "b_b":   u(keys[7], (1, 4 * H), k_lstm),
        # head_predictor: Linear(2H -> 1)
        "w_head": u(keys[8], (2 * H, 1), k_lin),
        "b_head": u(keys[9], (1, 1), k_lin),
        # dep_predictor: Linear(2H -> dep_vocab)
        "w_dep": u(keys[10], (2 * H, D), k_lin),
        "b_dep": u(keys[11], (1, D), k_lin),
    }

    words = jax.random.randint(keys[12], (T,), 0, word_vocab_size, dtype=jnp.int32)
    pos = jax.random.randint(keys[13], (T,), 0, pos_vocab_size, dtype=jnp.int32)

    head_logits, dep_logits = jax.jit(bilstm_dependency_parser)(words, pos, params)
    jax.block_until_ready((head_logits, dep_logits))

    assert head_logits.shape == (T, 1), head_logits.shape
    assert dep_logits.shape == (T, D), dep_logits.shape
    assert bool(jnp.all(jnp.isfinite(head_logits)))
    assert bool(jnp.all(jnp.isfinite(dep_logits)))

    # Correctness vs. pure-JAX bidirectional-LSTM reference.
    head_ref, dep_ref = jax.jit(reference_forward)(words, pos, params)
    jax.block_until_ready((head_ref, dep_ref))
    assert jnp.allclose(head_logits, head_ref, rtol=1e-3, atol=1e-4), (
        float(jnp.max(jnp.abs(head_logits - head_ref))))
    assert jnp.allclose(dep_logits, dep_ref, rtol=1e-3, atol=1e-4), (
        float(jnp.max(jnp.abs(dep_logits - dep_ref))))

    print("KERNEL_OK")
</pallas_src>

<mosaic_0001>
module attributes {stable_mosaic.version = 11 : i64} {
  func.func @bilstm_parser_kernel(%arg0: memref<8x64xf32, #tpu.memory_space<vmem>>, %arg1: memref<64x256xf32, #tpu.memory_space<vmem>>, %arg2: memref<1x256xf32, #tpu.memory_space<vmem>>, %arg3: memref<64x256xf32, #tpu.memory_space<vmem>>, %arg4: memref<32x128xf32, #tpu.memory_space<vmem>>, %arg5: memref<32x128xf32, #tpu.memory_space<vmem>>, %arg6: memref<1x128xf32, #tpu.memory_space<vmem>>, %arg7: memref<8x128xf32, #tpu.memory_space<vmem>>, %arg8: memref<8x256xf32, #tpu.memory_space<vmem>>, %arg9: memref<8x32xf32, #tpu.memory_space<vmem>>, %arg10: memref<8x32xf32, #tpu.memory_space<vmem>>) attributes {dimension_semantics = [], scalar_prefetch = 0 : i64, scratch_operands = 3 : i64, tpu.core_type = #tpu.core_type<tc>} {
    %c0 = arith.constant 0 : index
    %c0_0 = arith.constant 0 : index
    %0 = vector.load %arg0[%c0, %c0_0] : memref<8x64xf32, #tpu.memory_space<vmem>>, vector<8x64xf32>
    %c0_1 = arith.constant 0 : index
    %c0_2 = arith.constant 0 : index
    %1 = vector.load %arg1[%c0_1, %c0_2] : memref<64x256xf32, #tpu.memory_space<vmem>>, vector<64x256xf32>
    %cst = arith.constant dense<0.000000e+00> : vector<8x256xf32>
    %2 = tpu.matmul %0, %1, %cst {dimension_numbers = #tpu.dot_dimension_numbers<[1], [0], [0], [1], [0, 0, 1, 1], [], []>} : vector<8x64xf32>, vector<64x256xf32>, vector<8x256xf32> -> vector<8x256xf32>
    %c0_3 = arith.constant 0 : index
    %c0_4 = arith.constant 0 : index
    %3 = vector.load %arg2[%c0_3, %c0_4] : memref<1x256xf32, #tpu.memory_space<vmem>>, vector<1x256xf32>
    %4 = vector.broadcast %3 : vector<1x256xf32> to vector<8x256xf32>
    %5 = arith.addf %2, %4 : vector<8x256xf32>
    %c0_5 = arith.constant 0 : index
    %c0_6 = arith.constant 0 : index
    %6 = vector.load %arg8[%c0_5, %c0_6] : memref<8x256xf32, #tpu.memory_space<vmem>>, vector<8x256xf32>
    tpu.vector_store %arg8[%c0_5, %c0_6], %5 {strides = array<i32>} : memref<8x256xf32, #tpu.memory_space<vmem>>, vector<8x256xf32>,
    %c0_7 = arith.constant 0 : index
    %c0_8 = arith.constant 0 : index
    %7 = vector.load %arg3[%c0_7, %c0_8] : memref<64x256xf32, #tpu.memory_space<vmem>>, vector<64x256xf32>
    %cst_9 = arith.constant 0.000000e+00 : f32
    %8 = vector.broadcast %cst_9 : f32 to vector<1x64xf32>
    %cst_10 = arith.constant 0.000000e+00 : f32
    %9 = vector.broadcast %cst_10 : f32 to vector<1x64xf32>
    %c0_i32 = arith.constant 0 : i32
    %10 = arith.index_cast %c0_i32 : i32 to index
    %c0_11 = arith.constant 0 : index
    %11 = vector.load %arg8[%10, %c0_11] : memref<8x256xf32, #tpu.memory_space<vmem>>, vector<1x256xf32>
    %cst_12 = arith.constant dense<0.000000e+00> : vector<1x256xf32>
    %12 = tpu.matmul %8, %7, %cst_12 {dimension_numbers = #tpu.dot_dimension_numbers<[1], [0], [0], [1], [0, 0, 1, 1], [], []>} : vector<1x64xf32>, vector<64x256xf32>, vector<1x256xf32> -> vector<1x256xf32>
    %13 = arith.addf %11, %12 : vector<1x256xf32>
    %14 = vector.extract_strided_slice %13 {offsets = [0, 0], sizes = [1, 192], strides = [1, 1]} : vector<1x256xf32> to vector<1x192xf32>
    %15 = arith.negf %14 : vector<1x192xf32>
    %16 = math.exp %15 : vector<1x192xf32>
    %cst_13 = arith.constant 1.000000e+00 : f32
    %17 = vector.broadcast %cst_13 : f32 to vector<1x192xf32>
    %18 = arith.addf %17, %16 : vector<1x192xf32>
    %19 = arith.divf %17, %18 : vector<1x192xf32>
    %20 = vector.extract_strided_slice %13 {offsets = [0, 192], sizes = [1, 64], strides = [1, 1]} : vector<1x256xf32> to vector<1x64xf32>
    %21 = math.tanh %20 : vector<1x64xf32>
    %22 = vector.extract_strided_slice %19 {offsets = [0, 0], sizes = [1, 64], strides = [1, 1]} : vector<1x192xf32> to vector<1x64xf32>
    %23 = vector.extract_strided_slice %19 {offsets = [0, 64], sizes = [1, 64], strides = [1, 1]} : vector<1x192xf32> to vector<1x64xf32>
    %24 = vector.extract_strided_slice %19 {offsets = [0, 128], sizes = [1, 64], strides = [1, 1]} : vector<1x192xf32> to vector<1x64xf32>
    %25 = arith.mulf %23, %9 : vector<1x64xf32>
    %26 = arith.mulf %22, %21 : vector<1x64xf32>
    %27 = arith.addf %25, %26 : vector<1x64xf32>
    %28 = math.tanh %27 : vector<1x64xf32>
    %29 = arith.mulf %24, %28 : vector<1x64xf32>
    %30 = vector.extract_strided_slice %29 {offsets = [0, 0], sizes = [1, 32], strides = [1, 1]} : vector<1x64xf32> to vector<1x32xf32>
    %31 = arith.index_cast %c0_i32 : i32 to index
    %c0_14 = arith.constant 0 : index
    %32 = vector.load %arg9[%31, %c0_14] : memref<8x32xf32, #tpu.memory_space<vmem>>, vector<1x32xf32>
    tpu.vector_store %arg9[%31, %c0_14], %30 {strides = array<i32>} : memref<8x32xf32, #tpu.memory_space<vmem>>, vector<1x32xf32>,
    %33 = vector.extract_strided_slice %29 {offsets = [0, 32], sizes = [1, 32], strides = [1, 1]} : vector<1x64xf32> to vector<1x32xf32>
    %c7_i32 = arith.constant 7 : i32
    %34 = arith.subi %c7_i32, %c0_i32 : i32
    %35 = arith.index_cast %34 : i32 to index
    %c0_15 = arith.constant 0 : index
    %36 = vector.load %arg10[%35, %c0_15] : memref<8x32xf32, #tpu.memory_space<vmem>>, vector<1x32xf32>
    tpu.vector_store %arg10[%35, %c0_15], %33 {strides = array<i32>} : memref<8x32xf32, #tpu.memory_space<vmem>>, vector<1x32xf32>,
    %c1_i32 = arith.constant 1 : i32
    %37 = arith.index_cast %c1_i32 : i32 to index
    %c0_16 = arith.constant 0 : index
    %38 = vector.load %arg8[%37, %c0_16] : memref<8x256xf32, #tpu.memory_space<vmem>>, vector<1x256xf32>
    %cst_17 = arith.constant dense<0.000000e+00> : vector<1x256xf32>
    %39 = tpu.matmul %29, %7, %cst_17 {dimension_numbers = #tpu.dot_dimension_numbers<[1], [0], [0], [1], [0, 0, 1, 1], [], []>} : vector<1x64xf32>, vector<64x256xf32>, vector<1x256xf32> -> vector<1x256xf32>
    %40 = arith.addf %38, %39 : vector<1x256xf32>
    %41 = vector.extract_strided_slice %40 {offsets = [0, 0], sizes = [1, 192], strides = [1, 1]} : vector<1x256xf32> to vector<1x192xf32>
    %42 = arith.negf %41 : vector<1x192xf32>
    %43 = math.exp %42 : vector<1x192xf32>
    %cst_18 = arith.constant 1.000000e+00 : f32
    %44 = vector.broadcast %cst_18 : f32 to vector<1x192xf32>
    %45 = arith.addf %44, %43 : vector<1x192xf32>
    %46 = arith.divf %44, %45 : vector<1x192xf32>
    %47 = vector.extract_strided_slice %40 {offsets = [0, 192], sizes = [1, 64], strides = [1, 1]} : vector<1x256xf32> to vector<1x64xf32>
    %48 = math.tanh %47 : vector<1x64xf32>
    %49 = vector.extract_strided_slice %46 {offsets = [0, 0], sizes = [1, 64], strides = [1, 1]} : vector<1x192xf32> to vector<1x64xf32>
    %50 = vector.extract_strided_slice %46 {offsets = [0, 64], sizes = [1, 64], strides = [1, 1]} : vector<1x192xf32> to vector<1x64xf32>
    %51 = vector.extract_strided_slice %46 {offsets = [0, 128], sizes = [1, 64], strides = [1, 1]} : vector<1x192xf32> to vector<1x64xf32>
    %52 = arith.mulf %50, %27 : vector<1x64xf32>
    %53 = arith.mulf %49, %48 : vector<1x64xf32>
    %54 = arith.addf %52, %53 : vector<1x64xf32>
    %55 = math.tanh %54 : vector<1x64xf32>
    %56 = arith.mulf %51, %55 : vector<1x64xf32>
    %57 = vector.extract_strided_slice %56 {offsets = [0, 0], sizes = [1, 32], strides = [1, 1]} : vector<1x64xf32> to vector<1x32xf32>
    %58 = arith.index_cast %c1_i32 : i32 to index
    %c0_19 = arith.constant 0 : index
    %59 = vector.load %arg9[%58, %c0_19] : memref<8x32xf32, #tpu.memory_space<vmem>>, vector<1x32xf32>
    tpu.vector_store %arg9[%58, %c0_19], %57 {strides = array<i32>} : memref<8x32xf32, #tpu.memory_space<vmem>>, vector<1x32xf32>,
    %60 = vector.extract_strided_slice %56 {offsets = [0, 32], sizes = [1, 32], strides = [1, 1]} : vector<1x64xf32> to vector<1x32xf32>
    %c7_i32_20 = arith.constant 7 : i32
    %61 = arith.subi %c7_i32_20, %c1_i32 : i32
    %62 = arith.index_cast %61 : i32 to index
    %c0_21 = arith.constant 0 : index
    %63 = vector.load %arg10[%62, %c0_21] : memref<8x32xf32, #tpu.memory_space<vmem>>, vector<1x32xf32>
    tpu.vector_store %arg10[%62, %c0_21], %60 {strides = array<i32>} : memref<8x32xf32, #tpu.memory_space<vmem>>, vector<1x32xf32>,
    %c2_i32 = arith.constant 2 : i32
    %64 = arith.index_cast %c2_i32 : i32 to index
    %c0_22 = arith.constant 0 : index
    %65 = vector.load %arg8[%64, %c0_22] : memref<8x256xf32, #tpu.memory_space<vmem>>, vector<1x256xf32>
    %cst_23 = arith.constant dense<0.000000e+00> : vector<1x256xf32>
    %66 = tpu.matmul %56, %7, %cst_23 {dimension_numbers = #tpu.dot_dimension_numbers<[1], [0], [0], [1], [0, 0, 1, 1], [], []>} : vector<1x64xf32>, vector<64x256xf32>, vector<1x256xf32> -> vector<1x256xf32>
    %67 = arith.addf %65, %66 : vector<1x256xf32>
    %68 = vector.extract_strided_slice %67 {offsets = [0, 0], sizes = [1, 192], strides = [1, 1]} : vector<1x256xf32> to vector<1x192xf32>
    %69 = arith.negf %68 : vector<1x192xf32>
    %70 = math.exp %69 : vector<1x192xf32>
    %cst_24 = arith.constant 1.000000e+00 : f32
    %71 = vector.broadcast %cst_24 : f32 to vector<1x192xf32>
    %72 = arith.addf %71, %70 : vector<1x192xf32>
    %73 = arith.divf %71, %72 : vector<1x192xf32>
    %74 = vector.extract_strided_slice %67 {offsets = [0, 192], sizes = [1, 64], strides = [1, 1]} : vector<1x256xf32> to vector<1x64xf32>
    %75 = math.tanh %74 : vector<1x64xf32>
    %76 = vector.extract_strided_slice %73 {offsets = [0, 0], sizes = [1, 64], strides = [1, 1]} : vector<1x192xf32> to vector<1x64xf32>
    %77 = vector.extract_strided_slice %73 {offsets = [0, 64], sizes = [1, 64], strides = [1, 1]} : vector<1x192xf32> to vector<1x64xf32>
    %78 = vector.extract_strided_slice %73 {offsets = [0, 128], sizes = [1, 64], strides = [1, 1]} : vector<1x192xf32> to vector<1x64xf32>
    %79 = arith.mulf %77, %54 : vector<1x64xf32>
    %80 = arith.mulf %76, %75 : vector<1x64xf32>
    %81 = arith.addf %79, %80 : vector<1x64xf32>
    %82 = math.tanh %81 : vector<1x64xf32>
    %83 = arith.mulf %78, %82 : vector<1x64xf32>
    %84 = vector.extract_strided_slice %83 {offsets = [0, 0], sizes = [1, 32], strides = [1, 1]} : vector<1x64xf32> to vector<1x32xf32>
    %85 = arith.index_cast %c2_i32 : i32 to index
    %c0_25 = arith.constant 0 : index
    %86 = vector.load %arg9[%85, %c0_25] : memref<8x32xf32, #tpu.memory_space<vmem>>, vector<1x32xf32>
    tpu.vector_store %arg9[%85, %c0_25], %84 {strides = array<i32>} : memref<8x32xf32, #tpu.memory_space<vmem>>, vector<1x32xf32>,
    %87 = vector.extract_strided_slice %83 {offsets = [0, 32], sizes = [1, 32], strides = [1, 1]} : vector<1x64xf32> to vector<1x32xf32>
    %c7_i32_26 = arith.constant 7 : i32
    %88 = arith.subi %c7_i32_26, %c2_i32 : i32
    %89 = arith.index_cast %88 : i32 to index
    %c0_27 = arith.constant 0 : index
    %90 = vector.load %arg10[%89, %c0_27] : memref<8x32xf32, #tpu.memory_space<vmem>>, vector<1x32xf32>
    tpu.vector_store %arg10[%89, %c0_27], %87 {strides = array<i32>} : memref<8x32xf32, #tpu.memory_space<vmem>>, vector<1x32xf32>,
    %c3_i32 = arith.constant 3 : i32
    %91 = arith.index_cast %c3_i32 : i32 to index
    %c0_28 = arith.constant 0 : index
    %92 = vector.load %arg8[%91, %c0_28] : memref<8x256xf32, #tpu.memory_space<vmem>>, vector<1x256xf32>
    %cst_29 = arith.constant dense<0.000000e+00> : vector<1x256xf32>
    %93 = tpu.matmul %83, %7, %cst_29 {dimension_numbers = #tpu.dot_dimension_numbers<[1], [0], [0], [1], [0, 0, 1, 1], [], []>} : vector<1x64xf32>, vector<64x256xf32>, vector<1x256xf32> -> vector<1x256xf32>
    %94 = arith.addf %92, %93 : vector<1x256xf32>
    %95 = vector.extract_strided_slice %94 {offsets = [0, 0], sizes = [1, 192], strides = [1, 1]} : vector<1x256xf32> to vector<1x192xf32>
    %96 = arith.negf %95 : vector<1x192xf32>
    %97 = math.exp %96 : vector<1x192xf32>
    %cst_30 = arith.constant 1.000000e+00 : f32
    %98 = vector.broadcast %cst_30 : f32 to vector<1x192xf32>
    %99 = arith.addf %98, %97 : vector<1x192xf32>
    %100 = arith.divf %98, %99 : vector<1x192xf32>
    %101 = vector.extract_strided_slice %94 {offsets = [0, 192], sizes = [1, 64], strides = [1, 1]} : vector<1x256xf32> to vector<1x64xf32>
    %102 = math.tanh %101 : vector<1x64xf32>
    %103 = vector.extract_strided_slice %100 {offsets = [0, 0], sizes = [1, 64], strides = [1, 1]} : vector<1x192xf32> to vector<1x64xf32>
    %104 = vector.extract_strided_slice %100 {offsets = [0, 64], sizes = [1, 64], strides = [1, 1]} : vector<1x192xf32> to vector<1x64xf32>
    %105 = vector.extract_strided_slice %100 {offsets = [0, 128], sizes = [1, 64], strides = [1, 1]} : vector<1x192xf32> to vector<1x64xf32>
    %106 = arith.mulf %104, %81 : vector<1x64xf32>
    %107 = arith.mulf %103, %102 : vector<1x64xf32>
    %108 = arith.addf %106, %107 : vector<1x64xf32>
    %109 = math.tanh %108 : vector<1x64xf32>
    %110 = arith.mulf %105, %109 : vector<1x64xf32>
    %111 = vector.extract_strided_slice %110 {offsets = [0, 0], sizes = [1, 32], strides = [1, 1]} : vector<1x64xf32> to vector<1x32xf32>
    %112 = arith.index_cast %c3_i32 : i32 to index
    %c0_31 = arith.constant 0 : index
    %113 = vector.load %arg9[%112, %c0_31] : memref<8x32xf32, #tpu.memory_space<vmem>>, vector<1x32xf32>
    tpu.vector_store %arg9[%112, %c0_31], %111 {strides = array<i32>} : memref<8x32xf32, #tpu.memory_space<vmem>>, vector<1x32xf32>,
    %114 = vector.extract_strided_slice %110 {offsets = [0, 32], sizes = [1, 32], strides = [1, 1]} : vector<1x64xf32> to vector<1x32xf32>
    %c7_i32_32 = arith.constant 7 : i32
    %115 = arith.subi %c7_i32_32, %c3_i32 : i32
    %116 = arith.index_cast %115 : i32 to index
    %c0_33 = arith.constant 0 : index
    %117 = vector.load %arg10[%116, %c0_33] : memref<8x32xf32, #tpu.memory_space<vmem>>, vector<1x32xf32>
    tpu.vector_store %arg10[%116, %c0_33], %114 {strides = array<i32>} : memref<8x32xf32, #tpu.memory_space<vmem>>, vector<1x32xf32>,
    %c4_i32 = arith.constant 4 : i32
    %118 = arith.index_cast %c4_i32 : i32 to index
    %c0_34 = arith.constant 0 : index
    %119 = vector.load %arg8[%118, %c0_34] : memref<8x256xf32, #tpu.memory_space<vmem>>, vector<1x256xf32>
    %cst_35 = arith.constant dense<0.000000e+00> : vector<1x256xf32>
    %120 = tpu.matmul %110, %7, %cst_35 {dimension_numbers = #tpu.dot_dimension_numbers<[1], [0], [0], [1], [0, 0, 1, 1], [], []>} : vector<1x64xf32>, vector<64x256xf32>, vector<1x256xf32> -> vector<1x256xf32>
    %121 = arith.addf %119, %120 : vector<1x256xf32>
    %122 = vector.extract_strided_slice %121 {offsets = [0, 0], sizes = [1, 192], strides = [1, 1]} : vector<1x256xf32> to vector<1x192xf32>
    %123 = arith.negf %122 : vector<1x192xf32>
    %124 = math.exp %123 : vector<1x192xf32>
    %cst_36 = arith.constant 1.000000e+00 : f32
    %125 = vector.broadcast %cst_36 : f32 to vector<1x192xf32>
    %126 = arith.addf %125, %124 : vector<1x192xf32>
    %127 = arith.divf %125, %126 : vector<1x192xf32>
    %128 = vector.extract_strided_slice %121 {offsets = [0, 192], sizes = [1, 64], strides = [1, 1]} : vector<1x256xf32> to vector<1x64xf32>
    %129 = math.tanh %128 : vector<1x64xf32>
    %130 = vector.extract_strided_slice %127 {offsets = [0, 0], sizes = [1, 64], strides = [1, 1]} : vector<1x192xf32> to vector<1x64xf32>
    %131 = vector.extract_strided_slice %127 {offsets = [0, 64], sizes = [1, 64], strides = [1, 1]} : vector<1x192xf32> to vector<1x64xf32>
    %132 = vector.extract_strided_slice %127 {offsets = [0, 128], sizes = [1, 64], strides = [1, 1]} : vector<1x192xf32> to vector<1x64xf32>
    %133 = arith.mulf %131, %108 : vector<1x64xf32>
    %134 = arith.mulf %130, %129 : vector<1x64xf32>
    %135 = arith.addf %133, %134 : vector<1x64xf32>
    %136 = math.tanh %135 : vector<1x64xf32>
    %137 = arith.mulf %132, %136 : vector<1x64xf32>
    %138 = vector.extract_strided_slice %137 {offsets = [0, 0], sizes = [1, 32], strides = [1, 1]} : vector<1x64xf32> to vector<1x32xf32>
    %139 = arith.index_cast %c4_i32 : i32 to index
    %c0_37 = arith.constant 0 : index
    %140 = vector.load %arg9[%139, %c0_37] : memref<8x32xf32, #tpu.memory_space<vmem>>, vector<1x32xf32>
    tpu.vector_store %arg9[%139, %c0_37], %138 {strides = array<i32>} : memref<8x32xf32, #tpu.memory_space<vmem>>, vector<1x32xf32>,
    %141 = vector.extract_strided_slice %137 {offsets = [0, 32], sizes = [1, 32], strides = [1, 1]} : vector<1x64xf32> to vector<1x32xf32>
    %c7_i32_38 = arith.constant 7 : i32
    %142 = arith.subi %c7_i32_38, %c4_i32 : i32
    %143 = arith.index_cast %142 : i32 to index
    %c0_39 = arith.constant 0 : index
    %144 = vector.load %arg10[%143, %c0_39] : memref<8x32xf32, #tpu.memory_space<vmem>>, vector<1x32xf32>
    tpu.vector_store %arg10[%143, %c0_39], %141 {strides = array<i32>} : memref<8x32xf32, #tpu.memory_space<vmem>>, vector<1x32xf32>,
    %c5_i32 = arith.constant 5 : i32
    %145 = arith.index_cast %c5_i32 : i32 to index
    %c0_40 = arith.constant 0 : index
    %146 = vector.load %arg8[%145, %c0_40] : memref<8x256xf32, #tpu.memory_space<vmem>>, vector<1x256xf32>
    %cst_41 = arith.constant dense<0.000000e+00> : vector<1x256xf32>
    %147 = tpu.matmul %137, %7, %cst_41 {dimension_numbers = #tpu.dot_dimension_numbers<[1], [0], [0], [1], [0, 0, 1, 1], [], []>} : vector<1x64xf32>, vector<64x256xf32>, vector<1x256xf32> -> vector<1x256xf32>
    %148 = arith.addf %146, %147 : vector<1x256xf32>
    %149 = vector.extract_strided_slice %148 {offsets = [0, 0], sizes = [1, 192], strides = [1, 1]} : vector<1x256xf32> to vector<1x192xf32>
    %150 = arith.negf %149 : vector<1x192xf32>
    %151 = math.exp %150 : vector<1x192xf32>
    %cst_42 = arith.constant 1.000000e+00 : f32
    %152 = vector.broadcast %cst_42 : f32 to vector<1x192xf32>
    %153 = arith.addf %152, %151 : vector<1x192xf32>
    %154 = arith.divf %152, %153 : vector<1x192xf32>
    %155 = vector.extract_strided_slice %148 {offsets = [0, 192], sizes = [1, 64], strides = [1, 1]} : vector<1x256xf32> to vector<1x64xf32>
    %156 = math.tanh %155 : vector<1x64xf32>
    %157 = vector.extract_strided_slice %154 {offsets = [0, 0], sizes = [1, 64], strides = [1, 1]} : vector<1x192xf32> to vector<1x64xf32>
    %158 = vector.extract_strided_slice %154 {offsets = [0, 64], sizes = [1, 64], strides = [1, 1]} : vector<1x192xf32> to vector<1x64xf32>
    %159 = vector.extract_strided_slice %154 {offsets = [0, 128], sizes = [1, 64], strides = [1, 1]} : vector<1x192xf32> to vector<1x64xf32>
    %160 = arith.mulf %158, %135 : vector<1x64xf32>
    %161 = arith.mulf %157, %156 : vector<1x64xf32>
    %162 = arith.addf %160, %161 : vector<1x64xf32>
    %163 = math.tanh %162 : vector<1x64xf32>
    %164 = arith.mulf %159, %163 : vector<1x64xf32>
    %165 = vector.extract_strided_slice %164 {offsets = [0, 0], sizes = [1, 32], strides = [1, 1]} : vector<1x64xf32> to vector<1x32xf32>
    %166 = arith.index_cast %c5_i32 : i32 to index
    %c0_43 = arith.constant 0 : index
    %167 = vector.load %arg9[%166, %c0_43] : memref<8x32xf32, #tpu.memory_space<vmem>>, vector<1x32xf32>
    tpu.vector_store %arg9[%166, %c0_43], %165 {strides = array<i32>} : memref<8x32xf32, #tpu.memory_space<vmem>>, vector<1x32xf32>,
    %168 = vector.extract_strided_slice %164 {offsets = [0, 32], sizes = [1, 32], strides = [1, 1]} : vector<1x64xf32> to vector<1x32xf32>
    %c7_i32_44 = arith.constant 7 : i32
    %169 = arith.subi %c7_i32_44, %c5_i32 : i32
    %170 = arith.index_cast %169 : i32 to index
    %c0_45 = arith.constant 0 : index
    %171 = vector.load %arg10[%170, %c0_45] : memref<8x32xf32, #tpu.memory_space<vmem>>, vector<1x32xf32>
    tpu.vector_store %arg10[%170, %c0_45], %168 {strides = array<i32>} : memref<8x32xf32, #tpu.memory_space<vmem>>, vector<1x32xf32>,
    %c6_i32 = arith.constant 6 : i32
    %172 = arith.index_cast %c6_i32 : i32 to index
    %c0_46 = arith.constant 0 : index
    %173 = vector.load %arg8[%172, %c0_46] : memref<8x256xf32, #tpu.memory_space<vmem>>, vector<1x256xf32>
    %cst_47 = arith.constant dense<0.000000e+00> : vector<1x256xf32>
    %174 = tpu.matmul %164, %7, %cst_47 {dimension_numbers = #tpu.dot_dimension_numbers<[1], [0], [0], [1], [0, 0, 1, 1], [], []>} : vector<1x64xf32>, vector<64x256xf32>, vector<1x256xf32> -> vector<1x256xf32>
    %175 = arith.addf %173, %174 : vector<1x256xf32>
    %176 = vector.extract_strided_slice %175 {offsets = [0, 0], sizes = [1, 192], strides = [1, 1]} : vector<1x256xf32> to vector<1x192xf32>
    %177 = arith.negf %176 : vector<1x192xf32>
    %178 = math.exp %177 : vector<1x192xf32>
    %cst_48 = arith.constant 1.000000e+00 : f32
    %179 = vector.broadcast %cst_48 : f32 to vector<1x192xf32>
    %180 = arith.addf %179, %178 : vector<1x192xf32>
    %181 = arith.divf %179, %180 : vector<1x192xf32>
    %182 = vector.extract_strided_slice %175 {offsets = [0, 192], sizes = [1, 64], strides = [1, 1]} : vector<1x256xf32> to vector<1x64xf32>
    %183 = math.tanh %182 : vector<1x64xf32>
    %184 = vector.extract_strided_slice %181 {offsets = [0, 0], sizes = [1, 64], strides = [1, 1]} : vector<1x192xf32> to vector<1x64xf32>
    %185 = vector.extract_strided_slice %181 {offsets = [0, 64], sizes = [1, 64], strides = [1, 1]} : vector<1x192xf32> to vector<1x64xf32>
    %186 = vector.extract_strided_slice %181 {offsets = [0, 128], sizes = [1, 64], strides = [1, 1]} : vector<1x192xf32> to vector<1x64xf32>
    %187 = arith.mulf %185, %162 : vector<1x64xf32>
    %188 = arith.mulf %184, %183 : vector<1x64xf32>
    %189 = arith.addf %187, %188 : vector<1x64xf32>
    %190 = math.tanh %189 : vector<1x64xf32>
    %191 = arith.mulf %186, %190 : vector<1x64xf32>
    %192 = vector.extract_strided_slice %191 {offsets = [0, 0], sizes = [1, 32], strides = [1, 1]} : vector<1x64xf32> to vector<1x32xf32>
    %193 = arith.index_cast %c6_i32 : i32 to index
    %c0_49 = arith.constant 0 : index
    %194 = vector.load %arg9[%193, %c0_49] : memref<8x32xf32, #tpu.memory_space<vmem>>, vector<1x32xf32>
    tpu.vector_store %arg9[%193, %c0_49], %192 {strides = array<i32>} : memref<8x32xf32, #tpu.memory_space<vmem>>, vector<1x32xf32>,
    %195 = vector.extract_strided_slice %191 {offsets = [0, 32], sizes = [1, 32], strides = [1, 1]} : vector<1x64xf32> to vector<1x32xf32>
    %c7_i32_50 = arith.constant 7 : i32
    %196 = arith.subi %c7_i32_50, %c6_i32 : i32
    %197 = arith.index_cast %196 : i32 to index
    %c0_51 = arith.constant 0 : index
    %198 = vector.load %arg10[%197, %c0_51] : memref<8x32xf32, #tpu.memory_space<vmem>>, vector<1x32xf32>
    tpu.vector_store %arg10[%197, %c0_51], %195 {strides = array<i32>} : memref<8x32xf32, #tpu.memory_space<vmem>>, vector<1x32xf32>,
    %c7_i32_52 = arith.constant 7 : i32
    %199 = arith.index_cast %c7_i32_52 : i32 to index
    %c0_53 = arith.constant 0 : index
    %200 = vector.load %arg8[%199, %c0_53] : memref<8x256xf32, #tpu.memory_space<vmem>>, vector<1x256xf32>
    %cst_54 = arith.constant dense<0.000000e+00> : vector<1x256xf32>
    %201 = tpu.matmul %191, %7, %cst_54 {dimension_numbers = #tpu.dot_dimension_numbers<[1], [0], [0], [1], [0, 0, 1, 1], [], []>} : vector<1x64xf32>, vector<64x256xf32>, vector<1x256xf32> -> vector<1x256xf32>
    %202 = arith.addf %200, %201 : vector<1x256xf32>
    %203 = vector.extract_strided_slice %202 {offsets = [0, 0], sizes = [1, 192], strides = [1, 1]} : vector<1x256xf32> to vector<1x192xf32>
    %204 = arith.negf %203 : vector<1x192xf32>
    %205 = math.exp %204 : vector<1x192xf32>
    %cst_55 = arith.constant 1.000000e+00 : f32
    %206 = vector.broadcast %cst_55 : f32 to vector<1x192xf32>
    %207 = arith.addf %206, %205 : vector<1x192xf32>
    %208 = arith.divf %206, %207 : vector<1x192xf32>
    %209 = vector.extract_strided_slice %202 {offsets = [0, 192], sizes = [1, 64], strides = [1, 1]} : vector<1x256xf32> to vector<1x64xf32>
    %210 = math.tanh %209 : vector<1x64xf32>
    %211 = vector.extract_strided_slice %208 {offsets = [0, 0], sizes = [1, 64], strides = [1, 1]} : vector<1x192xf32> to vector<1x64xf32>
    %212 = vector.extract_strided_slice %208 {offsets = [0, 64], sizes = [1, 64], strides = [1, 1]} : vector<1x192xf32> to vector<1x64xf32>
    %213 = vector.extract_strided_slice %208 {offsets = [0, 128], sizes = [1, 64], strides = [1, 1]} : vector<1x192xf32> to vector<1x64xf32>
    %214 = arith.mulf %212, %189 : vector<1x64xf32>
    %215 = arith.mulf %211, %210 : vector<1x64xf32>
    %216 = arith.addf %214, %215 : vector<1x64xf32>
    %217 = math.tanh %216 : vector<1x64xf32>
    %218 = arith.mulf %213, %217 : vector<1x64xf32>
    %219 = vector.extract_strided_slice %218 {offsets = [0, 0], sizes = [1, 32], strides = [1, 1]} : vector<1x64xf32> to vector<1x32xf32>
    %220 = arith.index_cast %c7_i32_52 : i32 to index
    %c0_56 = arith.constant 0 : index
    %221 = vector.load %arg9[%220, %c0_56] : memref<8x32xf32, #tpu.memory_space<vmem>>, vector<1x32xf32>
    tpu.vector_store %arg9[%220, %c0_56], %219 {strides = array<i32>} : memref<8x32xf32, #tpu.memory_space<vmem>>, vector<1x32xf32>,
    %222 = vector.extract_strided_slice %218 {offsets = [0, 32], sizes = [1, 32], strides = [1, 1]} : vector<1x64xf32> to vector<1x32xf32>
    %c7_i32_57 = arith.constant 7 : i32
    %223 = arith.subi %c7_i32_57, %c7_i32_52 : i32
    %224 = arith.index_cast %223 : i32 to index
    %c0_58 = arith.constant 0 : index
    %225 = vector.load %arg10[%224, %c0_58] : memref<8x32xf32, #tpu.memory_space<vmem>>, vector<1x32xf32>
    tpu.vector_store %arg10[%224, %c0_58], %222 {strides = array<i32>} : memref<8x32xf32, #tpu.memory_space<vmem>>, vector<1x32xf32>,
    %c8_i32 = arith.constant 8 : i32
    %c0_59 = arith.constant 0 : index
    %c0_60 = arith.constant 0 : index
    %226 = vector.load %arg9[%c0_59, %c0_60] : memref<8x32xf32, #tpu.memory_space<vmem>>, vector<8x32xf32>
    %c0_61 = arith.constant 0 : index
    %c0_62 = arith.constant 0 : index
    %227 = vector.load %arg4[%c0_61, %c0_62] : memref<32x128xf32, #tpu.memory_space<vmem>>, vector<32x128xf32>
    %cst_63 = arith.constant dense<0.000000e+00> : vector<8x128xf32>
    %228 = tpu.matmul %226, %227, %cst_63 {dimension_numbers = #tpu.dot_dimension_numbers<[1], [0], [0], [1], [0, 0, 1, 1], [], []>} : vector<8x32xf32>, vector<32x128xf32>, vector<8x128xf32> -> vector<8x128xf32>
    %c0_64 = arith.constant 0 : index
    %c0_65 = arith.constant 0 : index
    %229 = vector.load %arg10[%c0_64, %c0_65] : memref<8x32xf32, #tpu.memory_space<vmem>>, vector<8x32xf32>
    %c0_66 = arith.constant 0 : index
    %c0_67 = arith.constant 0 : index
    %230 = vector.load %arg5[%c0_66, %c0_67] : memref<32x128xf32, #tpu.memory_space<vmem>>, vector<32x128xf32>
    %cst_68 = arith.constant dense<0.000000e+00> : vector<8x128xf32>
    %231 = tpu.matmul %229, %230, %cst_68 {dimension_numbers = #tpu.dot_dimension_numbers<[1], [0], [0], [1], [0, 0, 1, 1], [], []>} : vector<8x32xf32>, vector<32x128xf32>, vector<8x128xf32> -> vector<8x128xf32>
    %232 = arith.addf %228, %231 : vector<8x128xf32>
    %c0_69 = arith.constant 0 : index
    %c0_70 = arith.constant 0 : index
    %233 = vector.load %arg6[%c0_69, %c0_70] : memref<1x128xf32, #tpu.memory_space<vmem>>, vector<1x128xf32>
    %234 = vector.broadcast %233 : vector<1x128xf32> to vector<8x128xf32>
    %235 = arith.addf %232, %234 : vector<8x128xf32>
    %c0_71 = arith.constant 0 : index
    %c0_72 = arith.constant 0 : index
    %236 = vector.load %arg7[%c0_71, %c0_72] : memref<8x128xf32, #tpu.memory_space<vmem>>, vector<8x128xf32>
    tpu.vector_store %arg7[%c0_71, %c0_72], %235 {strides = array<i32>} : memref<8x128xf32, #tpu.memory_space<vmem>>, vector<8x128xf32>,
    return
  }
}

</mosaic_0001>

<llo_original>
// kernel: bilstm_dependency_parser.1
$region0: #{bilstm_dependency_parser.1}
  #allocation0 [shape = 'u32[]', space=smem, size = 0x4, offset = 0x4, fixed_abs, tag = 'smem constant byte address 0x4 - core index']
  #allocation1 [shape = 'u32[144,128]{1,0:T(1,128)}', space=vmem, size = 0x12000, scoped, tag = 'internal scratch']
  #allocation2 [shape = 'f32[8,256]{1,0:T(8,128)}', space=vmem, size = 0x2000, scoped, tag = 'scratch operand']
  #allocation3 [shape = 'f32[8,32]{1,0:T(8,128)}', space=vmem, size = 0x1000, scoped, tag = 'scratch operand']
  #allocation4 [shape = 'f32[8,32]{1,0:T(8,128)}', space=vmem, size = 0x1000, scoped, tag = 'scratch operand']
  %s0 = inlined_call_operand.vmem [shape: f32[8,64], index: 0, kind: input, shape index: {}]
  %s1 = inlined_call_operand.vmem [shape: f32[64,256], index: 1, kind: input, shape index: {}]
  %s2 = inlined_call_operand.vmem [shape: f32[1,256], index: 2, kind: input, shape index: {}]
  %s3 = inlined_call_operand.vmem [shape: f32[64,256], index: 3, kind: input, shape index: {}]
  %s4 = inlined_call_operand.vmem [shape: f32[32,128], index: 4, kind: input, shape index: {}]
  %s5 = inlined_call_operand.vmem [shape: f32[32,128], index: 5, kind: input, shape index: {}]
  %s6 = inlined_call_operand.vmem [shape: f32[1,128], index: 6, kind: input, shape index: {}]
  %s7 = inlined_call_operand.vmem [shape: f32[8,128], index: 7, kind: output, shape index: {}]
  %s8 = sld [smem:[#allocation0]]
  $region38: #{bilstm_dependency_parser.1} parent=0
    _
  %s10 = ssub.s32 1, %s8
  %s11 = scalar_select 0, %s10, %s8
  // Predicated region
  $region2: #{bilstm_dependency_parser.1} parent=0 // pred_check
    _
  $region3: #{bilstm_dependency_parser.1} parent=0 // pred_check_branch
    %13 = sbr.rel (0) target = $region5
  $region4: #{bilstm_dependency_parser.1} parent=0 // pred_region
    _
  $region5: #{bilstm_dependency_parser.1} parent=0 // pred_fallthru
    _
  // Predicated region
  $region6: #{bilstm_dependency_parser.1} parent=0 // pred_check
    _
  $region7: #{bilstm_dependency_parser.1} parent=0 // pred_check_branch
    %15 = sbr.rel (0) target = $region9
  $region8: #{bilstm_dependency_parser.1} parent=0 // pred_region
    _
  $region9: #{bilstm_dependency_parser.1} parent=0 // pred_fallthru
    _
  // Predicated region
  $region10: #{bilstm_dependency_parser.1} parent=0 // pred_check
    _
  $region11: #{bilstm_dependency_parser.1} parent=0 // pred_check_branch
    %17 = sbr.rel (0) target = $region13
  $region12: #{bilstm_dependency_parser.1} parent=0 // pred_region
    _
  $region13: #{bilstm_dependency_parser.1} parent=0 // pred_fallthru
    _
  // Predicated region
  $region14: #{bilstm_dependency_parser.1} parent=0 // pred_check
    _
  $region15: #{bilstm_dependency_parser.1} parent=0 // pred_check_branch
    %19 = sbr.rel (0) target = $region17
  $region16: #{bilstm_dependency_parser.1} parent=0 // pred_region
    _
  $region17: #{bilstm_dependency_parser.1} parent=0 // pred_fallthru
    _
  // Predicated region
  $region18: #{bilstm_dependency_parser.1} parent=0 // pred_check
    _
  $region19: #{bilstm_dependency_parser.1} parent=0 // pred_check_branch
    %21 = sbr.rel (0) target = $region21
  $region20: #{bilstm_dependency_parser.1} parent=0 // pred_region
    _
  $region21: #{bilstm_dependency_parser.1} parent=0 // pred_fallthru
    _
  // Predicated region
  $region22: #{bilstm_dependency_parser.1} parent=0 // pred_check
    _
  $region23: #{bilstm_dependency_parser.1} parent=0 // pred_check_branch
    %23 = sbr.rel (0) target = $region25
  $region24: #{bilstm_dependency_parser.1} parent=0 // pred_region
    _
  $region25: #{bilstm_dependency_parser.1} parent=0 // pred_fallthru
    _
  // Predicated region
  $region26: #{bilstm_dependency_parser.1} parent=0 // pred_check
    _
  $region27: #{bilstm_dependency_parser.1} parent=0 // pred_check_branch
    %25 = sbr.rel (0) target = $region29
  $region28: #{bilstm_dependency_parser.1} parent=0 // pred_region
    _
  $region29: #{bilstm_dependency_parser.1} parent=0 // pred_fallthru
    _
  %v26 = vld [vmem:[%s0] sm:$0xff]
  %v27 = vld [vmem:[%s1] sm:$0xff]
  %v28 = vld [vmem:[%s1 + $0x8] sm:$0xff]
  %v29 = vld [vmem:[%s1 + $0x10] sm:$0xff]
  %v30 = vld [vmem:[%s1 + $0x18] sm:$0xff]
  %v31 = vld [vmem:[%s1 + $0x20] sm:$0xff]
  %v32 = vld [vmem:[%s1 + $0x28] sm:$0xff]
  %v33 = vld [vmem:[%s1 + $0x30] sm:$0xff]
  %v34 = vld [vmem:[%s1 + $0x38] sm:$0xff]
  %v35 = vld [vmem:[%s1 + $0x40] sm:$0xff]
  %v36 = vld [vmem:[%s1 + $0x48] sm:$0xff]
  %v37 = vld [vmem:[%s1 + $0x50] sm:$0xff]
  %v38 = vld [vmem:[%s1 + $0x58] sm:$0xff]
  %v39 = vld [vmem:[%s1 + $0x60] sm:$0xff]
  %v40 = vld [vmem:[%s1 + $0x68] sm:$0xff]
  %v41 = vld [vmem:[%s1 + $0x70] sm:$0xff]
  %v42 = vld [vmem:[%s1 + $0x78] sm:$0xff]
  %v43 = vld [vmem:[%s2] sm:$0x3]
  %v45 = vlaneseq
  %v46 = vshrl.u32 %v45, 7
  %v47 = vsub.s32 0, %v46
  %v48 = vrot.slane %v43, %v47
  %v49 = vlaneseq
  %v50 = vshrl.u32 %v49, 7
  %v51 = vsub.s32 1, %v50
  %v52 = vrot.slane %v43, %v51
  %vm55 = vcmask 523264
  %v57 = vsel %vm55, %v26, 0
  %59 = vmatprep.subr.mxu0 %v28
  %60 = vmatpush1.msra.mxu0 %v27
  %61 = vmatprep.subr.mxu0 %v30
  %62 = vmatpush1.msra.mxu0 %v29
  %63 = vmatprep.subr.mxu0 %v32
  %64 = vmatpush1.msra.mxu0 %v31
  %65 = vmatprep.subr.mxu0 %v34
  %66 = vmatpush1.msra.mxu0 %v33
  %67 = vmatprep.subr.mxu0 %v36
  %68 = vmatpush1.msra.mxu0 %v35
  %69 = vmatprep.subr.mxu0 %v38
  %70 = vmatpush1.msra.mxu0 %v37
  %71 = vmatprep.subr.mxu0 %v40
  %72 = vmatpush1.msra.mxu0 %v39
  %73 = vmatprep.subr.mxu0 %v42
  %74 = vmatpush1.msra.mxu0 %v41
  %75 = vmatprep.subr.mxu0 0.0
  %76 = vmatpush1.msra.mxu0 0.0
  %77 = vmatprep.subr.mxu0 0.0
  %78 = vmatpush1.msra.mxu0 0.0
  %79 = vmatprep.subr.mxu0 0.0
  %80 = vmatpush1.msra.mxu0 0.0
  %81 = vmatprep.subr.mxu0 0.0
  %82 = vmatpush1.msra.mxu0 0.0
  %83 = vmatprep.subr.mxu0 0.0
  %84 = vmatpush1.msra.mxu0 0.0
  %85 = vmatprep.subr.mxu0 0.0
  %86 = vmatpush1.msra.mxu0 0.0
  %87 = vmatprep.subr.mxu0 0.0
  %88 = vmatpush1.msra.mxu0 0.0
  %89 = vmatprep.subr.mxu0 0.0
  %90 = vmatpush1.msra.mxu0 0.0
  %91 = vmatprep.subr.mxu0 0.0
  %92 = vmatpush1.msra.mxu0 0.0
  %93 = vmatprep.subr.mxu0 0.0
  %94 = vmatpush1.msra.mxu0 0.0
  %95 = vmatprep.subr.mxu0 0.0
  %96 = vmatpush1.msra.mxu0 0.0
  %97 = vmatprep.subr.mxu0 0.0
  %98 = vmatpush1.msra.mxu0 0.0
  %99 = vmatprep.subr.mxu0 0.0
  %100 = vmatpush1.msra.mxu0 0.0
  %101 = vmatprep.subr.mxu0 0.0
  %102 = vmatpush1.msra.mxu0 0.0
  %103 = vmatprep.subr.mxu0 0.0
  %104 = vmatpush1.msra.mxu0 0.0
  %105 = vmatprep.subr.mxu0 0.0
  %106 = vmatpush1.msra.mxu0 0.0
  %107 = vmatprep.subr.mxu0 0.0
  %108 = vmatpush1.msra.mxu0 0.0
  %109 = vmatprep.subr.mxu0 0.0
  %110 = vmatpush1.msra.mxu0 0.0
  %111 = vmatprep.subr.mxu0 0.0
  %112 = vmatpush1.msra.mxu0 0.0
  %113 = vmatprep.subr.mxu0 0.0
  %114 = vmatpush1.msra.mxu0 0.0
  %115 = vmatprep.subr.mxu0 0.0
  %116 = vmatpush1.msra.mxu0 0.0
  %117 = vmatprep.subr.mxu0 0.0
  %118 = vmatpush1.msra.mxu0 0.0
  %119 = vmatprep.subr.mxu0 0.0
  %120 = vmatpush1.msra.mxu0 0.0
  %121 = vmatprep.subr.mxu0 0.0
  %122 = vmatpush1.msra.mxu0 0.0
  %123 = vmatprep.mubr.f32.mxu0 0.0
  %124 = vmatmul.mubr.f32.gmra.mrb[0].mxu0 %v57
  %v125 = vpop.f32.mrb[0].mxu0
  %v126 = vadd.f32 %v48, %v125
  %v127 = vpop.f32.mrb[0].mxu0
  %v128 = vadd.f32 %v52, %v127
  %129 = vdwg.mxu0
  %130 = vst [vmem:[#allocation2] sm:$0xff] %v126
  %131 = vst [vmem:[#allocation2 + $0x8] sm:$0xff] %v128
  %v132 = vld [vmem:[%s3] sm:$0xff]
  %v133 = vld [vmem:[%s3 + $0x8] sm:$0xff]
  %v134 = vld [vmem:[%s3 + $0x10] sm:$0xff]
  %v135 = vld [vmem:[%s3 + $0x18] sm:$0xff]
  %v136 = vld [vmem:[%s3 + $0x20] sm:$0xff]
  %v137 = vld [vmem:[%s3 + $0x28] sm:$0xff]
  %v138 = vld [vmem:[%s3 + $0x30] sm:$0xff]
  %v139 = vld [vmem:[%s3 + $0x38] sm:$0xff]
  %v140 = vld [vmem:[%s3 + $0x40] sm:$0xff]
  %v141 = vld [vmem:[%s3 + $0x48] sm:$0xff]
  %v142 = vld [vmem:[%s3 + $0x50] sm:$0xff]
  %v143 = vld [vmem:[%s3 + $0x58] sm:$0xff]
  %v144 = vld [vmem:[%s3 + $0x60] sm:$0xff]
  %v145 = vld [vmem:[%s3 + $0x68] sm:$0xff]
  %v146 = vld [vmem:[%s3 + $0x70] sm:$0xff]
  %v147 = vld [vmem:[%s3 + $0x78] sm:$0xff]
  %v148 = vld [vmem:[#allocation2] ss:$8 sm:$0x3]
  %v150 = vsel %vm55, 0.0, 0
  %152 = vmatprep.subr.mxu0 %v133
  %153 = vmatpush1.msra.mxu0 %v132
  %154 = vmatprep.subr.mxu0 %v135
  %155 = vmatpush1.msra.mxu0 %v134
  %156 = vmatprep.subr.mxu0 %v137
  %157 = vmatpush1.msra.mxu0 %v136
  %158 = vmatprep.subr.mxu0 %v139
  %159 = vmatpush1.msra.mxu0 %v138
  %160 = vmatprep.subr.mxu0 %v141
  %161 = vmatpush1.msra.mxu0 %v140
  %162 = vmatprep.subr.mxu0 %v143
  %163 = vmatpush1.msra.mxu0 %v142
  %164 = vmatprep.subr.mxu0 %v145
  %165 = vmatpush1.msra.mxu0 %v144
  %166 = vmatprep.subr.mxu0 %v147
  %167 = vmatpush1.msra.mxu0 %v146
  %168 = vmatprep.subr.mxu0 0.0
  %169 = vmatpush1.msra.mxu0 0.0
  %170 = vmatprep.subr.mxu0 0.0
  %171 = vmatpush1.msra.mxu0 0.0
  %172 = vmatprep.subr.mxu0 0.0
  %173 = vmatpush1.msra.mxu0 0.0
  %174 = vmatprep.subr.mxu0 0.0
  %175 = vmatpush1.msra.mxu0 0.0
  %176 = vmatprep.subr.mxu0 0.0
  %177 = vmatpush1.msra.mxu0 0.0
  %178 = vmatprep.subr.mxu0 0.0
  %179 = vmatpush1.msra.mxu0 0.0
  %180 = vmatprep.subr.mxu0 0.0
  %181 = vmatpush1.msra.mxu0 0.0
  %182 = vmatprep.subr.mxu0 0.0
  %183 = vmatpush1.msra.mxu0 0.0
  %184 = vmatprep.subr.mxu0 0.0
  %185 = vmatpush1.msra.mxu0 0.0
  %186 = vmatprep.subr.mxu0 0.0
  %187 = vmatpush1.msra.mxu0 0.0
  %188 = vmatprep.subr.mxu0 0.0
  %189 = vmatpush1.msra.mxu0 0.0
  %190 = vmatprep.subr.mxu0 0.0
  %191 = vmatpush1.msra.mxu0 0.0
  %192 = vmatprep.subr.mxu0 0.0
  %193 = vmatpush1.msra.mxu0 0.0
  %194 = vmatprep.subr.mxu0 0.0
  %195 = vmatpush1.msra.mxu0 0.0
  %196 = vmatprep.subr.mxu0 0.0
  %197 = vmatpush1.msra.mxu0 0.0
  %198 = vmatprep.subr.mxu0 0.0
  %199 = vmatpush1.msra.mxu0 0.0
  %200 = vmatprep.subr.mxu0 0.0
  %201 = vmatpush1.msra.mxu0 0.0
  %202 = vmatprep.subr.mxu0 0.0
  %203 = vmatpush1.msra.mxu0 0.0
  %204 = vmatprep.subr.mxu0 0.0
  %205 = vmatpush1.msra.mxu0 0.0
  %206 = vmatprep.subr.mxu0 0.0
  %207 = vmatpush1.msra.mxu0 0.0
  %208 = vmatprep.subr.mxu0 0.0
  %209 = vmatpush1.msra.mxu0 0.0
  %210 = vmatprep.subr.mxu0 0.0
  %211 = vmatpush1.msra.mxu0 0.0
  %212 = vmatprep.subr.mxu0 0.0
  %213 = vmatpush1.msra.mxu0 0.0
  %214 = vmatprep.subr.mxu0 0.0
  %215 = vmatpush1.msra.mxu0 0.0
  %216 = vmatprep.mubr.f32.mxu0 0.0
  %217 = vmatmul.mubr.f32.gmra.mrb[0].mxu0 %v150
  %v218 = vpop.f32.mrb[0].mxu0
  %v219 = vadd.f32 0.0, %v218
  %v220 = vpop.f32.mrb[0].mxu0
  %v221 = vadd.f32 0.0, %v220
  %222 = vdwg.mxu0
  %v225 = vcombine.low %v219, %v221
  %v227 = vunpack.c.l.s4 1966171168
  %v228 = vunpack.c.0.s8 %v227
  %v229 = vlaneseq
  %v230 = vshrl.u32 %v229, 7
  %v231 = vsub.s32 %v228, %v230
  %v232 = vrot.slane %v225, %v231
  %v234 = vunpack.c.l.s4 1966171168
  %v235 = vunpack.c.0.s8 %v234
  %v236 = vlaneseq
  %v237 = vshrl.u32 %v236, 7
  %v238 = vsub.s32 %v235, %v237
  %v239 = vrot.slane %v232, %v238
  %v241 = vadd.f32 %v148, %v239
  %v242 = vxor.u32 %v241, 2147483648
  %v243 = vmul.f32 %v242, 1.442695
  %v244 = vpow.pop %v243
  %v245 = vadd.f32 %v244, 1.0
  %v246 = vrcp.pop %v245
  %v247 = vmul.f32 1.0, %v246
  %249 = vrot.lane.b32.xlu0 %v241, 64
  %v250 = vpop.permute.xlu0 %249
  %v251 = vrot.slane %v250, 1
  %v253 = vtanh.pop %v251
  %v254 = vmul.f32 %v247, 0.0
  %v255 = vmul.f32 %v247, %v253
  %257 = vrot.lane.b32.xlu0 %v255, 64
  %v258 = vpop.permute.xlu0 %257
  %v260 = vadd.f32 %v254, %v258
  %v261 = vtanh.pop %v260
  %v263 = vrot.slane %v247, 1
  %266 = vrot.lane.b32.xlu0 %v261, 64
  %v267 = vpop.permute.xlu0 %266
  %v269 = vmul.f32 %v263, %v267
  %vm270 = vcmask 253952
  %271 = vst.msk [vmem:[#allocation3] sm:$0x1] %vm270, %v269
  %v273 = vlaneseq
  %v274 = vshrl.u32 %v273, 7
  %v275 = vsub.s32 0, %v274
  %v276 = vrot.slane %v269, %v275
  %277 = vrot.lane.b32.xlu0 %v276, 96
  %v278 = vpop.permute.xlu0 %277
  %280 = vst.msk [vmem:[#allocation4 + $0x7] sm:$0x1] %vm270, %v278
  %s281 = scalar_lea.vmem [#allocation2], 1
  %v282 = vld [vmem:[%s281] ss:$8 sm:$0x3]
  %v283 = vsel %vm55, %v269, 0
  %285 = vmatprep.subr.mxu0 %v133
  %286 = vmatpush1.msra.mxu0 %v132
  %287 = vmatprep.subr.mxu0 %v135
  %288 = vmatpush1.msra.mxu0 %v134
  %289 = vmatprep.subr.mxu0 %v137
  %290 = vmatpush1.msra.mxu0 %v136
  %291 = vmatprep.subr.mxu0 %v139
  %292 = vmatpush1.msra.mxu0 %v138
  %293 = vmatprep.subr.mxu0 %v141
  %294 = vmatpush1.msra.mxu0 %v140
  %295 = vmatprep.subr.mxu0 %v143
  %296 = vmatpush1.msra.mxu0 %v142
  %297 = vmatprep.subr.mxu0 %v145
  %298 = vmatpush1.msra.mxu0 %v144
  %299 = vmatprep.subr.mxu0 %v147
  %300 = vmatpush1.msra.mxu0 %v146
  %301 = vmatprep.subr.mxu0 0.0
  %302 = vmatpush1.msra.mxu0 0.0
  %303 = vmatprep.subr.mxu0 0.0
  %304 = vmatpush1.msra.mxu0 0.0
  %305 = vmatprep.subr.mxu0 0.0
  %306 = vmatpush1.msra.mxu0 0.0
  %307 = vmatprep.subr.mxu0 0.0
  %308 = vmatpush1.msra.mxu0 0.0
  %309 = vmatprep.subr.mxu0 0.0
  %310 = vmatpush1.msra.mxu0 0.0
  %311 = vmatprep.subr.mxu0 0.0
  %312 = vmatpush1.msra.mxu0 0.0
  %313 = vmatprep.subr.mxu0 0.0
  %314 = vmatpush1.msra.mxu0 0.0
  %315 = vmatprep.subr.mxu0 0.0
  %316 = vmatpush1.msra.mxu0 0.0
  %317 = vmatprep.subr.mxu0 0.0
  %318 = vmatpush1.msra.mxu0 0.0
  %319 = vmatprep.subr.mxu0 0.0
  %320 = vmatpush1.msra.mxu0 0.0
  %321 = vmatprep.subr.mxu0 0.0
  %322 = vmatpush1.msra.mxu0 0.0
  %323 = vmatprep.subr.mxu0 0.0
  %324 = vmatpush1.msra.mxu0 0.0
  %325 = vmatprep.subr.mxu0 0.0
  %326 = vmatpush1.msra.mxu0 0.0
  %327 = vmatprep.subr.mxu0 0.0
  %328 = vmatpush1.msra.mxu0 0.0
  %329 = vmatprep.subr.mxu0 0.0
  %330 = vmatpush1.msra.mxu0 0.0
  %331 = vmatprep.subr.mxu0 0.0
  %332 = vmatpush1.msra.mxu0 0.0
  %333 = vmatprep.subr.mxu0 0.0
  %334 = vmatpush1.msra.mxu0 0.0
  %335 = vmatprep.subr.mxu0 0.0
  %336 = vmatpush1.msra.mxu0 0.0
  %337 = vmatprep.subr.mxu0 0.0
  %338 = vmatpush1.msra.mxu0 0.0
  %339 = vmatprep.subr.mxu0 0.0
  %340 = vmatpush1.msra.mxu0 0.0
  %341 = vmatprep.subr.mxu0 0.0
  %342 = vmatpush1.msra.mxu0 0.0
  %343 = vmatprep.subr.mxu0 0.0
  %344 = vmatpush1.msra.mxu0 0.0
  %345 = vmatprep.subr.mxu0 0.0
  %346 = vmatpush1.msra.mxu0 0.0
  %347 = vmatprep.subr.mxu0 0.0
  %348 = vmatpush1.msra.mxu0 0.0
  %349 = vmatprep.mubr.f32.mxu0 0.0
  %350 = vmatmul.mubr.f32.gmra.mrb[0].mxu0 %v283
  %v351 = vpop.f32.mrb[0].mxu0
  %v352 = vadd.f32 0.0, %v351
  %v353 = vpop.f32.mrb[0].mxu0
  %v354 = vadd.f32 0.0, %v353
  %355 = vdwg.mxu0
  %v358 = vcombine.low %v352, %v354
  %v360 = vunpack.c.l.s4 1966171168
  %v361 = vunpack.c.0.s8 %v360
  %v362 = vlaneseq
  %v363 = vshrl.u32 %v362, 7
  %v364 = vsub.s32 %v361, %v363
  %v365 = vrot.slane %v358, %v364
  %v367 = vunpack.c.l.s4 1966171168
  %v368 = vunpack.c.0.s8 %v367
  %v369 = vlaneseq
  %v370 = vshrl.u32 %v369, 7
  %v371 = vsub.s32 %v368, %v370
  %v372 = vrot.slane %v365, %v371
  %v374 = vadd.f32 %v282, %v372
  %v375 = vxor.u32 %v374, 2147483648
  %v376 = vmul.f32 %v375, 1.442695
  %v377 = vpow.pop %v376
  %v378 = vadd.f32 %v377, 1.0
  %v379 = vrcp.pop %v378
  %v380 = vmul.f32 1.0, %v379
  %382 = vrot.lane.b32.xlu0 %v374, 64
  %v383 = vpop.permute.xlu0 %382
  %v384 = vrot.slane %v383, 1
  %v386 = vtanh.pop %v384
  %v387 = vmul.f32 %v380, %v260
  %v388 = vmul.f32 %v380, %v386
  %390 = vrot.lane.b32.xlu0 %v388, 64
  %v391 = vpop.permute.xlu0 %390
  %v393 = vadd.f32 %v387, %v391
  %v394 = vtanh.pop %v393
  %v396 = vrot.slane %v380, 1
  %399 = vrot.lane.b32.xlu0 %v394, 64
  %v400 = vpop.permute.xlu0 %399
  %v402 = vmul.f32 %v396, %v400
  %403 = vst.msk [vmem:[#allocation3 + $0x1] sm:$0x1] %vm270, %v402
  %v405 = vlaneseq
  %v406 = vshrl.u32 %v405, 7
  %v407 = vsub.s32 0, %v406
  %v408 = vrot.slane %v402, %v407
  %409 = vrot.lane.b32.xlu0 %v408, 96
  %v410 = vpop.permute.xlu0 %409
  %412 = vst.msk [vmem:[#allocation4 + $0x6] sm:$0x1] %vm270, %v410
  %s413 = scalar_lea.vmem [#allocation2], 2
  %v414 = vld [vmem:[%s413] ss:$8 sm:$0x3]
  %v415 = vsel %vm55, %v402, 0
  %417 = vmatprep.subr.mxu0 %v133
  %418 = vmatpush1.msra.mxu0 %v132
  %419 = vmatprep.subr.mxu0 %v135
  %420 = vmatpush1.msra.mxu0 %v134
  %421 = vmatprep.subr.mxu0 %v137
  %422 = vmatpush1.msra.mxu0 %v136
  %423 = vmatprep.subr.mxu0 %v139
  %424 = vmatpush1.msra.mxu0 %v138
  %425 = vmatprep.subr.mxu0 %v141
  %426 = vmatpush1.msra.mxu0 %v140
  %427 = vmatprep.subr.mxu0 %v143
  %428 = vmatpush1.msra.mxu0 %v142
  %429 = vmatprep.subr.mxu0 %v145
  %430 = vmatpush1.msra.mxu0 %v144
  %431 = vmatprep.subr.mxu0 %v147
  %432 = vmatpush1.msra.mxu0 %v146
  %433 = vmatprep.subr.mxu0 0.0
  %434 = vmatpush1.msra.mxu0 0.0
  %435 = vmatprep.subr.mxu0 0.0
  %436 = vmatpush1.msra.mxu0 0.0
  %437 = vmatprep.subr.mxu0 0.0
  %438 = vmatpush1.msra.mxu0 0.0
  %439 = vmatprep.subr.mxu0 0.0
  %440 = vmatpush1.msra.mxu0 0.0
  %441 = vmatprep.subr.mxu0 0.0
  %442 = vmatpush1.msra.mxu0 0.0
  %443 = vmatprep.subr.mxu0 0.0
  %444 = vmatpush1.msra.mxu0 0.0
  %445 = vmatprep.subr.mxu0 0.0
  %446 = vmatpush1.msra.mxu0 0.0
  %447 = vmatprep.subr.mxu0 0.0
  %448 = vmatpush1.msra.mxu0 0.0
  %449 = vmatprep.subr.mxu0 0.0
  %450 = vmatpush1.msra.mxu0 0.0
  %451 = vmatprep.subr.mxu0 0.0
  %452 = vmatpush1.msra.mxu0 0.0
  %453 = vmatprep.subr.mxu0 0.0
  %454 = vmatpush1.msra.mxu0 0.0
  %455 = vmatprep.subr.mxu0 0.0
  %456 = vmatpush1.msra.mxu0 0.0
  %457 = vmatprep.subr.mxu0 0.0
  %458 = vmatpush1.msra.mxu0 0.0
  %459 = vmatprep.subr.mxu0 0.0
  %460 = vmatpush1.msra.mxu0 0.0
  %461 = vmatprep.subr.mxu0 0.0
  %462 = vmatpush1.msra.mxu0 0.0
  %463 = vmatprep.subr.mxu0 0.0
  %464 = vmatpush1.msra.mxu0 0.0
  %465 = vmatprep.subr.mxu0 0.0
  %466 = vmatpush1.msra.mxu0 0.0
  %467 = vmatprep.subr.mxu0 0.0
  %468 = vmatpush1.msra.mxu0 0.0
  %469 = vmatprep.subr.mxu0 0.0
  %470 = vmatpush1.msra.mxu0 0.0
  %471 = vmatprep.subr.mxu0 0.0
  %472 = vmatpush1.msra.mxu0 0.0
  %473 = vmatprep.subr.mxu0 0.0
  %474 = vmatpush1.msra.mxu0 0.0
  %475 = vmatprep.subr.mxu0 0.0
  %476 = vmatpush1.msra.mxu0 0.0
  %477 = vmatprep.subr.mxu0 0.0
  %478 = vmatpush1.msra.mxu0 0.0
  %479 = vmatprep.subr.mxu0 0.0
  %480 = vmatpush1.msra.mxu0 0.0
  %481 = vmatprep.mubr.f32.mxu0 0.0
  %482 = vmatmul.mubr.f32.gmra.mrb[0].mxu0 %v415
  %v483 = vpop.f32.mrb[0].mxu0
  %v484 = vadd.f32 0.0, %v483
  %v485 = vpop.f32.mrb[0].mxu0
  %v486 = vadd.f32 0.0, %v485
  %487 = vdwg.mxu0
  %v490 = vcombine.low %v484, %v486
  %v492 = vunpack.c.l.s4 1966171168
  %v493 = vunpack.c.0.s8 %v492
  %v494 = vlaneseq
  %v495 = vshrl.u32 %v494, 7
  %v496 = vsub.s32 %v493, %v495
  %v497 = vrot.slane %v490, %v496
  %v499 = vunpack.c.l.s4 1966171168
  %v500 = vunpack.c.0.s8 %v499
  %v501 = vlaneseq
  %v502 = vshrl.u32 %v501, 7
  %v503 = vsub.s32 %v500, %v502
  %v504 = vrot.slane %v497, %v503
  %v506 = vadd.f32 %v414, %v504
  %v507 = vxor.u32 %v506, 2147483648
  %v508 = vmul.f32 %v507, 1.442695
  %v509 = vpow.pop %v508
  %v510 = vadd.f32 %v509, 1.0
  %v511 = vrcp.pop %v510
  %v512 = vmul.f32 1.0, %v511
  %514 = vrot.lane.b32.xlu0 %v506, 64
  %v515 = vpop.permute.xlu0 %514
  %v516 = vrot.slane %v515, 1
  %v518 = vtanh.pop %v516
  %v519 = vmul.f32 %v512, %v393
  %v520 = vmul.f32 %v512, %v518
  %522 = vrot.lane.b32.xlu0 %v520, 64
  %v523 = vpop.permute.xlu0 %522
  %v525 = vadd.f32 %v519, %v523
  %v526 = vtanh.pop %v525
  %v528 = vrot.slane %v512, 1
  %531 = vrot.lane.b32.xlu0 %v526, 64
  %v532 = vpop.permute.xlu0 %531
  %v534 = vmul.f32 %v528, %v532
  %535 = vst.msk [vmem:[#allocation3 + $0x2] sm:$0x1] %vm270, %v534
  %v537 = vlaneseq
  %v538 = vshrl.u32 %v537, 7
  %v539 = vsub.s32 0, %v538
  %v540 = vrot.slane %v534, %v539
  %541 = vrot.lane.b32.xlu0 %v540, 96
  %v542 = vpop.permute.xlu0 %541
  %544 = vst.msk [vmem:[#allocation4 + $0x5] sm:$0x1] %vm270, %v542
  %s545 = scalar_lea.vmem [#allocation2], 3
  %v546 = vld [vmem:[%s545] ss:$8 sm:$0x3]
  %v547 = vsel %vm55, %v534, 0
  %549 = vmatprep.subr.mxu0 %v133
  %550 = vmatpush1.msra.mxu0 %v132
  %551 = vmatprep.subr.mxu0 %v135
  %552 = vmatpush1.msra.mxu0 %v134
  %553 = vmatprep.subr.mxu0 %v137
  %554 = vmatpush1.msra.mxu0 %v136
  %555 = vmatprep.subr.mxu0 %v139
  %556 = vmatpush1.msra.mxu0 %v138
  %557 = vmatprep.subr.mxu0 %v141
  %558 = vmatpush1.msra.mxu0 %v140
  %559 = vmatprep.subr.mxu0 %v143
  %560 = vmatpush1.msra.mxu0 %v142
  %561 = vmatprep.subr.mxu0 %v145
  %562 = vmatpush1.msra.mxu0 %v144
  %563 = vmatprep.subr.mxu0 %v147
  %564 = vmatpush1.msra.mxu0 %v146
  %565 = vmatprep.subr.mxu0 0.0
  %566 = vmatpush1.msra.mxu0 0.0
  %567 = vmatprep.subr.mxu0 0.0
  %568 = vmatpush1.msra.mxu0 0.0
  %569 = vmatprep.subr.mxu0 0.0
  %570 = vmatpush1.msra.mxu0 0.0
  %571 = vmatprep.subr.mxu0 0.0
  %572 = vmatpush1.msra.mxu0 0.0
  %573 = vmatprep.subr.mxu0 0.0
  %574 = vmatpush1.msra.mxu0 0.0
  %575 = vmatprep.subr.mxu0 0.0
  %576 = vmatpush1.msra.mxu0 0.0
  %577 = vmatprep.subr.mxu0 0.0
  %578 = vmatpush1.msra.mxu0 0.0
  %579 = vmatprep.subr.mxu0 0.0
  %580 = vmatpush1.msra.mxu0 0.0
  %581 = vmatprep.subr.mxu0 0.0
  %582 = vmatpush1.msra.mxu0 0.0
  %583 = vmatprep.subr.mxu0 0.0
  %584 = vmatpush1.msra.mxu0 0.0
  %585 = vmatprep.subr.mxu0 0.0
  %586 = vmatpush1.msra.mxu0 0.0
  %587 = vmatprep.subr.mxu0 0.0
  %588 = vmatpush1.msra.mxu0 0.0
  %589 = vmatprep.subr.mxu0 0.0
  %590 = vmatpush1.msra.mxu0 0.0
  %591 = vmatprep.subr.mxu0 0.0
  %592 = vmatpush1.msra.mxu0 0.0
  %593 = vmatprep.subr.mxu0 0.0
  %594 = vmatpush1.msra.mxu0 0.0
  %595 = vmatprep.subr.mxu0 0.0
  %596 = vmatpush1.msra.mxu0 0.0
  %597 = vmatprep.subr.mxu0 0.0
  %598 = vmatpush1.msra.mxu0 0.0
  %599 = vmatprep.subr.mxu0 0.0
  %600 = vmatpush1.msra.mxu0 0.0
  %601 = vmatprep.subr.mxu0 0.0
  %602 = vmatpush1.msra.mxu0 0.0
  %603 = vmatprep.subr.mxu0 0.0
  %604 = vmatpush1.msra.mxu0 0.0
  %605 = vmatprep.subr.mxu0 0.0
  %606 = vmatpush1.msra.mxu0 0.0
  %607 = vmatprep.subr.mxu0 0.0
  %608 = vmatpush1.msra.mxu0 0.0
  %609 = vmatprep.subr.mxu0 0.0
  %610 = vmatpush1.msra.mxu0 0.0
  %611 = vmatprep.subr.mxu0 0.0
  %612 = vmatpush1.msra.mxu0 0.0
  %613 = vmatprep.mubr.f32.mxu0 0.0
  %614 = vmatmul.mubr.f32.gmra.mrb[0].mxu0 %v547
  %v615 = vpop.f32.mrb[0].mxu0
  %v616 = vadd.f32 0.0, %v615
  %v617 = vpop.f32.mrb[0].mxu0
  %v618 = vadd.f32 0.0, %v617
  %619 = vdwg.mxu0
  %v622 = vcombine.low %v616, %v618
  %v624 = vunpack.c.l.s4 1966171168
  %v625 = vunpack.c.0.s8 %v624
  %v626 = vlaneseq
  %v627 = vshrl.u32 %v626, 7
  %v628 = vsub.s32 %v625, %v627
  %v629 = vrot.slane %v622, %v628
  %v631 = vunpack.c.l.s4 1966171168
  %v632 = vunpack.c.0.s8 %v631
  %v633 = vlaneseq
  %v634 = vshrl.u32 %v633, 7
  %v635 = vsub.s32 %v632, %v634
  %v636 = vrot.slane %v629, %v635
  %v638 = vadd.f32 %v546, %v636
  %v639 = vxor.u32 %v638, 2147483648
  %v640 = vmul.f32 %v639, 1.442695
  %v641 = vpow.pop %v640
  %v642 = vadd.f32 %v641, 1.0
  %v643 = vrcp.pop %v642
  %v644 = vmul.f32 1.0, %v643
  %646 = vrot.lane.b32.xlu0 %v638, 64
  %v647 = vpop.permute.xlu0 %646
  %v648 = vrot.slane %v647, 1
  %v650 = vtanh.pop %v648
  %v651 = vmul.f32 %v644, %v525
  %v652 = vmul.f32 %v644, %v650
  %654 = vrot.lane.b32.xlu0 %v652, 64
  %v655 = vpop.permute.xlu0 %654
  %v657 = vadd.f32 %v651, %v655
  %v658 = vtanh.pop %v657
  %v660 = vrot.slane %v644, 1
  %663 = vrot.lane.b32.xlu0 %v658, 64
  %v664 = vpop.permute.xlu0 %663
  %v666 = vmul.f32 %v660, %v664
  %667 = vst.msk [vmem:[#allocation3 + $0x3] sm:$0x1] %vm270, %v666
  %v669 = vlaneseq
  %v670 = vshrl.u32 %v669, 7
  %v671 = vsub.s32 0, %v670
  %v672 = vrot.slane %v666, %v671
  %673 = vrot.lane.b32.xlu0 %v672, 96
  %v674 = vpop.permute.xlu0 %673
  %676 = vst.msk [vmem:[#allocation4 + $0x4] sm:$0x1] %vm270, %v674
  %s677 = scalar_lea.vmem [#allocation2], 4
  %v678 = vld [vmem:[%s677] ss:$8 sm:$0x3]
  %v679 = vsel %vm55, %v666, 0
  %681 = vmatprep.subr.mxu0 %v133
  %682 = vmatpush1.msra.mxu0 %v132
  %683 = vmatprep.subr.mxu0 %v135
  %684 = vmatpush1.msra.mxu0 %v134
  %685 = vmatprep.subr.mxu0 %v137
  %686 = vmatpush1.msra.mxu0 %v136
  %687 = vmatprep.subr.mxu0 %v139
  %688 = vmatpush1.msra.mxu0 %v138
  %689 = vmatprep.subr.mxu0 %v141
  %690 = vmatpush1.msra.mxu0 %v140
  %691 = vmatprep.subr.mxu0 %v143
  %692 = vmatpush1.msra.mxu0 %v142
  %693 = vmatprep.subr.mxu0 %v145
  %694 = vmatpush1.msra.mxu0 %v144
  %695 = vmatprep.subr.mxu0 %v147
  %696 = vmatpush1.msra.mxu0 %v146
  %697 = vmatprep.subr.mxu0 0.0
  %698 = vmatpush1.msra.mxu0 0.0
  %699 = vmatprep.subr.mxu0 0.0
  %700 = vmatpush1.msra.mxu0 0.0
  %701 = vmatprep.subr.mxu0 0.0
  %702 = vmatpush1.msra.mxu0 0.0
  %703 = vmatprep.subr.mxu0 0.0
  %704 = vmatpush1.msra.mxu0 0.0
  %705 = vmatprep.subr.mxu0 0.0
  %706 = vmatpush1.msra.mxu0 0.0
  %707 = vmatprep.subr.mxu0 0.0
  %708 = vmatpush1.msra.mxu0 0.0
  %709 = vmatprep.subr.mxu0 0.0
  %710 = vmatpush1.msra.mxu0 0.0
  %711 = vmatprep.subr.mxu0 0.0
  %712 = vmatpush1.msra.mxu0 0.0
  %713 = vmatprep.subr.mxu0 0.0
  %714 = vmatpush1.msra.mxu0 0.0
  %715 = vmatprep.subr.mxu0 0.0
  %716 = vmatpush1.msra.mxu0 0.0
  %717 = vmatprep.subr.mxu0 0.0
  %718 = vmatpush1.msra.mxu0 0.0
  %719 = vmatprep.subr.mxu0 0.0
  %720 = vmatpush1.msra.mxu0 0.0
  %721 = vmatprep.subr.mxu0 0.0
  %722 = vmatpush1.msra.mxu0 0.0
  %723 = vmatprep.subr.mxu0 0.0
  %724 = vmatpush1.msra.mxu0 0.0
  %725 = vmatprep.subr.mxu0 0.0
  %726 = vmatpush1.msra.mxu0 0.0
  %727 = vmatprep.subr.mxu0 0.0
  %728 = vmatpush1.msra.mxu0 0.0
  %729 = vmatprep.subr.mxu0 0.0
  %730 = vmatpush1.msra.mxu0 0.0
  %731 = vmatprep.subr.mxu0 0.0
  %732 = vmatpush1.msra.mxu0 0.0
  %733 = vmatprep.subr.mxu0 0.0
  %734 = vmatpush1.msra.mxu0 0.0
  %735 = vmatprep.subr.mxu0 0.0
  %736 = vmatpush1.msra.mxu0 0.0
  %737 = vmatprep.subr.mxu0 0.0
  %738 = vmatpush1.msra.mxu0 0.0
  %739 = vmatprep.subr.mxu0 0.0
  %740 = vmatpush1.msra.mxu0 0.0
  %741 = vmatprep.subr.mxu0 0.0
  %742 = vmatpush1.msra.mxu0 0.0
  %743 = vmatprep.subr.mxu0 0.0
  %744 = vmatpush1.msra.mxu0 0.0
  %745 = vmatprep.mubr.f32.mxu0 0.0
  %746 = vmatmul.mubr.f32.gmra.mrb[0].mxu0 %v679
  %v747 = vpop.f32.mrb[0].mxu0
  %v748 = vadd.f32 0.0, %v747
  %v749 = vpop.f32.mrb[0].mxu0
  %v750 = vadd.f32 0.0, %v749
  %751 = vdwg.mxu0
  %v754 = vcombine.low %v748, %v750
  %v756 = vunpack.c.l.s4 1966171168
  %v757 = vunpack.c.0.s8 %v756
  %v758 = vlaneseq
  %v759 = vshrl.u32 %v758, 7
  %v760 = vsub.s32 %v757, %v759
  %v761 = vrot.slane %v754, %v760
  %v763 = vunpack.c.l.s4 1966171168
  %v764 = vunpack.c.0.s8 %v763
  %v765 = vlaneseq
  %v766 = vshrl.u32 %v765, 7
  %v767 = vsub.s32 %v764, %v766
  %v768 = vrot.slane %v761, %v767
  %v770 = vadd.f32 %v678, %v768
  %v771 = vxor.u32 %v770, 2147483648
  %v772 = vmul.f32 %v771, 1.442695
  %v773 = vpow.pop %v772
  %v774 = vadd.f32 %v773, 1.0
  %v775 = vrcp.pop %v774
  %v776 = vmul.f32 1.0, %v775
  %778 = vrot.lane.b32.xlu0 %v770, 64
  %v779 = vpop.permute.xlu0 %778
  %v780 = vrot.slane %v779, 1
  %v782 = vtanh.pop %v780
  %v783 = vmul.f32 %v776, %v657
  %v784 = vmul.f32 %v776, %v782
  %786 = vrot.lane.b32.xlu0 %v784, 64
  %v787 = vpop.permute.xlu0 %786
  %v789 = vadd.f32 %v783, %v787
  %v790 = vtanh.pop %v789
  %v792 = vrot.slane %v776, 1
  %795 = vrot.lane.b32.xlu0 %v790, 64
  %v796 = vpop.permute.xlu0 %795
  %v798 = vmul.f32 %v792, %v796
  %799 = vst.msk [vmem:[#allocation3 + $0x4] sm:$0x1] %vm270, %v798
  %v801 = vlaneseq
  %v802 = vshrl.u32 %v801, 7
  %v803 = vsub.s32 0, %v802
  %v804 = vrot.slane %v798, %v803
  %805 = vrot.lane.b32.xlu0 %v804, 96
  %v806 = vpop.permute.xlu0 %805
  %808 = vst.msk [vmem:[#allocation4 + $0x3] sm:$0x1] %vm270, %v806
  %s809 = scalar_lea.vmem [#allocation2], 5
  %v810 = vld [vmem:[%s809] ss:$8 sm:$0x3]
  %v811 = vsel %vm55, %v798, 0
  %813 = vmatprep.subr.mxu0 %v133
  %814 = vmatpush1.msra.mxu0 %v132
  %815 = vmatprep.subr.mxu0 %v135
  %816 = vmatpush1.msra.mxu0 %v134
  %817 = vmatprep.subr.mxu0 %v137
  %818 = vmatpush1.msra.mxu0 %v136
  %819 = vmatprep.subr.mxu0 %v139
  %820 = vmatpush1.msra.mxu0 %v138
  %821 = vmatprep.subr.mxu0 %v141
  %822 = vmatpush1.msra.mxu0 %v140
  %823 = vmatprep.subr.mxu0 %v143
  %824 = vmatpush1.msra.mxu0 %v142
  %825 = vmatprep.subr.mxu0 %v145
  %826 = vmatpush1.msra.mxu0 %v144
  %827 = vmatprep.subr.mxu0 %v147
  %828 = vmatpush1.msra.mxu0 %v146
  %829 = vmatprep.subr.mxu0 0.0
  %830 = vmatpush1.msra.mxu0 0.0
  %831 = vmatprep.subr.mxu0 0.0
  %832 = vmatpush1.msra.mxu0 0.0
  %833 = vmatprep.subr.mxu0 0.0
  %834 = vmatpush1.msra.mxu0 0.0
  %835 = vmatprep.subr.mxu0 0.0
  %836 = vmatpush1.msra.mxu0 0.0
  %837 = vmatprep.subr.mxu0 0.0
  %838 = vmatpush1.msra.mxu0 0.0
  %839 = vmatprep.subr.mxu0 0.0
  %840 = vmatpush1.msra.mxu0 0.0
  %841 = vmatprep.subr.mxu0 0.0
  %842 = vmatpush1.msra.mxu0 0.0
  %843 = vmatprep.subr.mxu0 0.0
  %844 = vmatpush1.msra.mxu0 0.0
  %845 = vmatprep.subr.mxu0 0.0
  %846 = vmatpush1.msra.mxu0 0.0
  %847 = vmatprep.subr.mxu0 0.0
  %848 = vmatpush1.msra.mxu0 0.0
  %849 = vmatprep.subr.mxu0 0.0
  %850 = vmatpush1.msra.mxu0 0.0
  %851 = vmatprep.subr.mxu0 0.0
  %852 = vmatpush1.msra.mxu0 0.0
  %853 = vmatprep.subr.mxu0 0.0
  %854 = vmatpush1.msra.mxu0 0.0
  %855 = vmatprep.subr.mxu0 0.0
  %856 = vmatpush1.msra.mxu0 0.0
  %857 = vmatprep.subr.mxu0 0.0
  %858 = vmatpush1.msra.mxu0 0.0
  %859 = vmatprep.subr.mxu0 0.0
  %860 = vmatpush1.msra.mxu0 0.0
  %861 = vmatprep.subr.mxu0 0.0
  %862 = vmatpush1.msra.mxu0 0.0
  %863 = vmatprep.subr.mxu0 0.0
  %864 = vmatpush1.msra.mxu0 0.0
  %865 = vmatprep.subr.mxu0 0.0
  %866 = vmatpush1.msra.mxu0 0.0
  %867 = vmatprep.subr.mxu0 0.0
  %868 = vmatpush1.msra.mxu0 0.0
  %869 = vmatprep.subr.mxu0 0.0
  %870 = vmatpush1.msra.mxu0 0.0
  %871 = vmatprep.subr.mxu0 0.0
  %872 = vmatpush1.msra.mxu0 0.0
  %873 = vmatprep.subr.mxu0 0.0
  %874 = vmatpush1.msra.mxu0 0.0
  %875 = vmatprep.subr.mxu0 0.0
  %876 = vmatpush1.msra.mxu0 0.0
  %877 = vmatprep.mubr.f32.mxu0 0.0
  %878 = vmatmul.mubr.f32.gmra.mrb[0].mxu0 %v811
  %v879 = vpop.f32.mrb[0].mxu0
  %v880 = vadd.f32 0.0, %v879
  %v881 = vpop.f32.mrb[0].mxu0
  %v882 = vadd.f32 0.0, %v881
  %883 = vdwg.mxu0
  %v886 = vcombine.low %v880, %v882
  %v888 = vunpack.c.l.s4 1966171168
  %v889 = vunpack.c.0.s8 %v888
  %v890 = vlaneseq
  %v891 = vshrl.u32 %v890, 7
  %v892 = vsub.s32 %v889, %v891
  %v893 = vrot.slane %v886, %v892
  %v895 = vunpack.c.l.s4 1966171168
  %v896 = vunpack.c.0.s8 %v895
  %v897 = vlaneseq
  %v898 = vshrl.u32 %v897, 7
  %v899 = vsub.s32 %v896, %v898
  %v900 = vrot.slane %v893, %v899
  %v902 = vadd.f32 %v810, %v900
  %v903 = vxor.u32 %v902, 2147483648
  %v904 = vmul.f32 %v903, 1.442695
  %v905 = vpow.pop %v904
  %v906 = vadd.f32 %v905, 1.0
  %v907 = vrcp.pop %v906
  %v908 = vmul.f32 1.0, %v907
  %910 = vrot.lane.b32.xlu0 %v902, 64
  %v911 = vpop.permute.xlu0 %910
  %v912 = vrot.slane %v911, 1
  %v914 = vtanh.pop %v912
  %v915 = vmul.f32 %v908, %v789
  %v916 = vmul.f32 %v908, %v914
  %918 = vrot.lane.b32.xlu0 %v916, 64
  %v919 = vpop.permute.xlu0 %918
  %v921 = vadd.f32 %v915, %v919
  %v922 = vtanh.pop %v921
  %v924 = vrot.slane %v908, 1
  %927 = vrot.lane.b32.xlu0 %v922, 64
  %v928 = vpop.permute.xlu0 %927
  %v930 = vmul.f32 %v924, %v928
  %931 = vst.msk [vmem:[#allocation3 + $0x5] sm:$0x1] %vm270, %v930
  %v933 = vlaneseq
  %v934 = vshrl.u32 %v933, 7
  %v935 = vsub.s32 0, %v934
  %v936 = vrot.slane %v930, %v935
  %937 = vrot.lane.b32.xlu0 %v936, 96
  %v938 = vpop.permute.xlu0 %937
  %940 = vst.msk [vmem:[#allocation4 + $0x2] sm:$0x1] %vm270, %v938
  %s941 = scalar_lea.vmem [#allocation2], 6
  %v942 = vld [vmem:[%s941] ss:$8 sm:$0x3]
  %v943 = vsel %vm55, %v930, 0
  %945 = vmatprep.subr.mxu0 %v133
  %946 = vmatpush1.msra.mxu0 %v132
  %947 = vmatprep.subr.mxu0 %v135
  %948 = vmatpush1.msra.mxu0 %v134
  %949 = vmatprep.subr.mxu0 %v137
  %950 = vmatpush1.msra.mxu0 %v136
  %951 = vmatprep.subr.mxu0 %v139
  %952 = vmatpush1.msra.mxu0 %v138
  %953 = vmatprep.subr.mxu0 %v141
  %954 = vmatpush1.msra.mxu0 %v140
  %955 = vmatprep.subr.mxu0 %v143
  %956 = vmatpush1.msra.mxu0 %v142
  %957 = vmatprep.subr.mxu0 %v145
  %958 = vmatpush1.msra.mxu0 %v144
  %959 = vmatprep.subr.mxu0 %v147
  %960 = vmatpush1.msra.mxu0 %v146
  %961 = vmatprep.subr.mxu0 0.0
  %962 = vmatpush1.msra.mxu0 0.0
  %963 = vmatprep.subr.mxu0 0.0
  %964 = vmatpush1.msra.mxu0 0.0
  %965 = vmatprep.subr.mxu0 0.0
  %966 = vmatpush1.msra.mxu0 0.0
  %967 = vmatprep.subr.mxu0 0.0
  %968 = vmatpush1.msra.mxu0 0.0
  %969 = vmatprep.subr.mxu0 0.0
  %970 = vmatpush1.msra.mxu0 0.0
  %971 = vmatprep.subr.mxu0 0.0
  %972 = vmatpush1.msra.mxu0 0.0
  %973 = vmatprep.subr.mxu0 0.0
  %974 = vmatpush1.msra.mxu0 0.0
  %975 = vmatprep.subr.mxu0 0.0
  %976 = vmatpush1.msra.mxu0 0.0
  %977 = vmatprep.subr.mxu0 0.0
  %978 = vmatpush1.msra.mxu0 0.0
  %979 = vmatprep.subr.mxu0 0.0
  %980 = vmatpush1.msra.mxu0 0.0
  %981 = vmatprep.subr.mxu0 0.0
  %982 = vmatpush1.msra.mxu0 0.0
  %983 = vmatprep.subr.mxu0 0.0
  %984 = vmatpush1.msra.mxu0 0.0
  %985 = vmatprep.subr.mxu0 0.0
  %986 = vmatpush1.msra.mxu0 0.0
  %987 = vmatprep.subr.mxu0 0.0
  %988 = vmatpush1.msra.mxu0 0.0
  %989 = vmatprep.subr.mxu0 0.0
  %990 = vmatpush1.msra.mxu0 0.0
  %991 = vmatprep.subr.mxu0 0.0
  %992 = vmatpush1.msra.mxu0 0.0
  %993 = vmatprep.subr.mxu0 0.0
  %994 = vmatpush1.msra.mxu0 0.0
  %995 = vmatprep.subr.mxu0 0.0
  %996 = vmatpush1.msra.mxu0 0.0
  %997 = vmatprep.subr.mxu0 0.0
  %998 = vmatpush1.msra.mxu0 0.0
  %999 = vmatprep.subr.mxu0 0.0
  %1000 = vmatpush1.msra.mxu0 0.0
  %1001 = vmatprep.subr.mxu0 0.0
  %1002 = vmatpush1.msra.mxu0 0.0
  %1003 = vmatprep.subr.mxu0 0.0
  %1004 = vmatpush1.msra.mxu0 0.0
  %1005 = vmatprep.subr.mxu0 0.0
  %1006 = vmatpush1.msra.mxu0 0.0
  %1007 = vmatprep.subr.mxu0 0.0
  %1008 = vmatpush1.msra.mxu0 0.0
  %1009 = vmatprep.mubr.f32.mxu0 0.0
  %1010 = vmatmul.mubr.f32.gmra.mrb[0].mxu0 %v943
  %v1011 = vpop.f32.mrb[0].mxu0
  %v1012 = vadd.f32 0.0, %v1011
  %v1013 = vpop.f32.mrb[0].mxu0
  %v1014 = vadd.f32 0.0, %v1013
  %1015 = vdwg.mxu0
  %v1018 = vcombine.low %v1012, %v1014
  %v1020 = vunpack.c.l.s4 1966171168
  %v1021 = vunpack.c.0.s8 %v1020
  %v1022 = vlaneseq
  %v1023 = vshrl.u32 %v1022, 7
  %v1024 = vsub.s32 %v1021, %v1023
  %v1025 = vrot.slane %v1018, %v1024
  %v1027 = vunpack.c.l.s4 1966171168
  %v1028 = vunpack.c.0.s8 %v1027
  %v1029 = vlaneseq
  %v1030 = vshrl.u32 %v1029, 7
  %v1031 = vsub.s32 %v1028, %v1030
  %v1032 = vrot.slane %v1025, %v1031
  %v1034 = vadd.f32 %v942, %v1032
  %v1035 = vxor.u32 %v1034, 2147483648
  %v1036 = vmul.f32 %v1035, 1.442695
  %v1037 = vpow.pop %v1036
  %v1038 = vadd.f32 %v1037, 1.0
  %v1039 = vrcp.pop %v1038
  %v1040 = vmul.f32 1.0, %v1039
  %1042 = vrot.lane.b32.xlu0 %v1034, 64
  %v1043 = vpop.permute.xlu0 %1042
  %v1044 = vrot.slane %v1043, 1
  %v1046 = vtanh.pop %v1044
  %v1047 = vmul.f32 %v1040, %v921
  %v1048 = vmul.f32 %v1040, %v1046
  %1050 = vrot.lane.b32.xlu0 %v1048, 64
  %v1051 = vpop.permute.xlu0 %1050
  %v1053 = vadd.f32 %v1047, %v1051
  %v1054 = vtanh.pop %v1053
  %v1056 = vrot.slane %v1040, 1
  %1059 = vrot.lane.b32.xlu0 %v1054, 64
  %v1060 = vpop.permute.xlu0 %1059
  %v1062 = vmul.f32 %v1056, %v1060
  %1063 = vst.msk [vmem:[#allocation3 + $0x6] sm:$0x1] %vm270, %v1062
  %v1065 = vlaneseq
  %v1066 = vshrl.u32 %v1065, 7
  %v1067 = vsub.s32 0, %v1066
  %v1068 = vrot.slane %v1062, %v1067
  %1069 = vrot.lane.b32.xlu0 %v1068, 96
  %v1070 = vpop.permute.xlu0 %1069
  %1072 = vst.msk [vmem:[#allocation4 + $0x1] sm:$0x1] %vm270, %v1070
  %s1073 = scalar_lea.vmem [#allocation2], 7
  %v1074 = vld [vmem:[%s1073] ss:$8 sm:$0x3]
  %v1075 = vsel %vm55, %v1062, 0
  %1077 = vmatprep.subr.mxu0 %v133
  %1078 = vmatpush1.msra.mxu0 %v132
  %1079 = vmatprep.subr.mxu0 %v135
  %1080 = vmatpush1.msra.mxu0 %v134
  %1081 = vmatprep.subr.mxu0 %v137
  %1082 = vmatpush1.msra.mxu0 %v136
  %1083 = vmatprep.subr.mxu0 %v139
  %1084 = vmatpush1.msra.mxu0 %v138
  %1085 = vmatprep.subr.mxu0 %v141
  %1086 = vmatpush1.msra.mxu0 %v140
  %1087 = vmatprep.subr.mxu0 %v143
  %1088 = vmatpush1.msra.mxu0 %v142
  %1089 = vmatprep.subr.mxu0 %v145
  %1090 = vmatpush1.msra.mxu0 %v144
  %1091 = vmatprep.subr.mxu0 %v147
  %1092 = vmatpush1.msra.mxu0 %v146
  %1093 = vmatprep.subr.mxu0 0.0
  %1094 = vmatpush1.msra.mxu0 0.0
  %1095 = vmatprep.subr.mxu0 0.0
  %1096 = vmatpush1.msra.mxu0 0.0
  %1097 = vmatprep.subr.mxu0 0.0
  %1098 = vmatpush1.msra.mxu0 0.0
  %1099 = vmatprep.subr.mxu0 0.0
  %1100 = vmatpush1.msra.mxu0 0.0
  %1101 = vmatprep.subr.mxu0 0.0
  %1102 = vmatpush1.msra.mxu0 0.0
  %1103 = vmatprep.subr.mxu0 0.0
  %1104 = vmatpush1.msra.mxu0 0.0
  %1105 = vmatprep.subr.mxu0 0.0
  %1106 = vmatpush1.msra.mxu0 0.0
  %1107 = vmatprep.subr.mxu0 0.0
  %1108 = vmatpush1.msra.mxu0 0.0
  %1109 = vmatprep.subr.mxu0 0.0
  %1110 = vmatpush1.msra.mxu0 0.0
  %1111 = vmatprep.subr.mxu0 0.0
  %1112 = vmatpush1.msra.mxu0 0.0
  %1113 = vmatprep.subr.mxu0 0.0
  %1114 = vmatpush1.msra.mxu0 0.0
  %1115 = vmatprep.subr.mxu0 0.0
  %1116 = vmatpush1.msra.mxu0 0.0
  %1117 = vmatprep.subr.mxu0 0.0
  %1118 = vmatpush1.msra.mxu0 0.0
  %1119 = vmatprep.subr.mxu0 0.0
  %1120 = vmatpush1.msra.mxu0 0.0
  %1121 = vmatprep.subr.mxu0 0.0
  %1122 = vmatpush1.msra.mxu0 0.0
  %1123 = vmatprep.subr.mxu0 0.0
  %1124 = vmatpush1.msra.mxu0 0.0
  %1125 = vmatprep.subr.mxu0 0.0
  %1126 = vmatpush1.msra.mxu0 0.0
  %1127 = vmatprep.subr.mxu0 0.0
  %1128 = vmatpush1.msra.mxu0 0.0
  %1129 = vmatprep.subr.mxu0 0.0
  %1130 = vmatpush1.msra.mxu0 0.0
  %1131 = vmatprep.subr.mxu0 0.0
  %1132 = vmatpush1.msra.mxu0 0.0
  %1133 = vmatprep.subr.mxu0 0.0
  %1134 = vmatpush1.msra.mxu0 0.0
  %1135 = vmatprep.subr.mxu0 0.0
  %1136 = vmatpush1.msra.mxu0 0.0
  %1137 = vmatprep.subr.mxu0 0.0
  %1138 = vmatpush1.msra.mxu0 0.0
  %1139 = vmatprep.subr.mxu0 0.0
  %1140 = vmatpush1.msra.mxu0 0.0
  %1141 = vmatprep.mubr.f32.mxu0 0.0
  %1142 = vmatmul.mubr.f32.gmra.mrb[0].mxu0 %v1075
  %v1143 = vpop.f32.mrb[0].mxu0
  %v1144 = vadd.f32 0.0, %v1143
  %v1145 = vpop.f32.mrb[0].mxu0
  %v1146 = vadd.f32 0.0, %v1145
  %1147 = vdwg.mxu0
  %v1150 = vcombine.low %v1144, %v1146
  %v1152 = vunpack.c.l.s4 1966171168
  %v1153 = vunpack.c.0.s8 %v1152
  %v1154 = vlaneseq
  %v1155 = vshrl.u32 %v1154, 7
  %v1156 = vsub.s32 %v1153, %v1155
  %v1157 = vrot.slane %v1150, %v1156
  %v1159 = vunpack.c.l.s4 1966171168
  %v1160 = vunpack.c.0.s8 %v1159
  %v1161 = vlaneseq
  %v1162 = vshrl.u32 %v1161, 7
  %v1163 = vsub.s32 %v1160, %v1162
  %v1164 = vrot.slane %v1157, %v1163
  %v1166 = vadd.f32 %v1074, %v1164
  %v1167 = vxor.u32 %v1166, 2147483648
  %v1168 = vmul.f32 %v1167, 1.442695
  %v1169 = vpow.pop %v1168
  %v1170 = vadd.f32 %v1169, 1.0
  %v1171 = vrcp.pop %v1170
  %v1172 = vmul.f32 1.0, %v1171
  %1174 = vrot.lane.b32.xlu0 %v1166, 64
  %v1175 = vpop.permute.xlu0 %1174
  %v1176 = vrot.slane %v1175, 1
  %v1178 = vtanh.pop %v1176
  %v1179 = vmul.f32 %v1172, %v1053
  %v1180 = vmul.f32 %v1172, %v1178
  %1182 = vrot.lane.b32.xlu0 %v1180, 64
  %v1183 = vpop.permute.xlu0 %1182
  %v1185 = vadd.f32 %v1179, %v1183
  %v1186 = vtanh.pop %v1185
  %v1188 = vrot.slane %v1172, 1
  %1191 = vrot.lane.b32.xlu0 %v1186, 64
  %v1192 = vpop.permute.xlu0 %1191
  %v1194 = vmul.f32 %v1188, %v1192
  %1195 = vst.msk [vmem:[#allocation3 + $0x7] sm:$0x1] %vm270, %v1194
  %v1197 = vlaneseq
  %v1198 = vshrl.u32 %v1197, 7
  %v1199 = vsub.s32 0, %v1198
  %v1200 = vrot.slane %v1194, %v1199
  %1201 = vrot.lane.b32.xlu0 %v1200, 96
  %v1202 = vpop.permute.xlu0 %1201
  %1204 = vst.msk [vmem:[#allocation4] sm:$0x1] %vm270, %v1202
  %v1205 = vld [vmem:[#allocation3] sm:$0xff]
  %v1206 = vld [vmem:[%s4] sm:$0xff]
  %v1207 = vld [vmem:[%s4 + $0x8] sm:$0xff]
  %v1208 = vld [vmem:[%s4 + $0x10] sm:$0xff]
  %v1209 = vld [vmem:[%s4 + $0x18] sm:$0xff]
  %v1210 = vld [vmem:[#allocation4] sm:$0xff]
  %v1211 = vld [vmem:[%s5] sm:$0xff]
  %v1212 = vld [vmem:[%s5 + $0x8] sm:$0xff]
  %v1213 = vld [vmem:[%s5 + $0x10] sm:$0xff]
  %v1214 = vld [vmem:[%s5 + $0x18] sm:$0xff]
  %vm1215 = vcmask 261120
  %v1217 = vsel %vm1215, %v1210, 0
  %1219 = vmatprep.subr.mxu0 0.0
  %1220 = vmatpush1.msra.mxu0 %v1211
  %1221 = vmatprep.subr.mxu0 0.0
  %1222 = vmatpush1.msra.mxu0 %v1212
  %1223 = vmatprep.subr.mxu0 0.0
  %1224 = vmatpush1.msra.mxu0 %v1213
  %1225 = vmatprep.subr.mxu0 0.0
  %1226 = vmatpush1.msra.mxu0 %v1214
  %1227 = vmatprep.subr.mxu0 0.0
  %1228 = vmatpush1.msra.mxu0 0.0
  %1229 = vmatprep.subr.mxu0 0.0
  %1230 = vmatpush1.msra.mxu0 0.0
  %1231 = vmatprep.subr.mxu0 0.0
  %1232 = vmatpush1.msra.mxu0 0.0
  %1233 = vmatprep.subr.mxu0 0.0
  %1234 = vmatpush1.msra.mxu0 0.0
  %1235 = vmatprep.subr.mxu0 0.0
  %1236 = vmatpush1.msra.mxu0 0.0
  %1237 = vmatprep.subr.mxu0 0.0
  %1238 = vmatpush1.msra.mxu0 0.0
  %1239 = vmatprep.subr.mxu0 0.0
  %1240 = vmatpush1.msra.mxu0 0.0
  %1241 = vmatprep.subr.mxu0 0.0
  %1242 = vmatpush1.msra.mxu0 0.0
  %1243 = vmatprep.subr.mxu0 0.0
  %1244 = vmatpush1.msra.mxu0 0.0
  %1245 = vmatprep.subr.mxu0 0.0
  %1246 = vmatpush1.msra.mxu0 0.0
  %1247 = vmatprep.subr.mxu0 0.0
  %1248 = vmatpush1.msra.mxu0 0.0
  %1249 = vmatprep.subr.mxu0 0.0
  %1250 = vmatpush1.msra.mxu0 0.0
  %1251 = vmatprep.subr.mxu0 0.0
  %1252 = vmatpush1.msra.mxu0 0.0
  %1253 = vmatprep.subr.mxu0 0.0
  %1254 = vmatpush1.msra.mxu0 0.0
  %1255 = vmatprep.subr.mxu0 0.0
  %1256 = vmatpush1.msra.mxu0 0.0
  %1257 = vmatprep.subr.mxu0 0.0
  %1258 = vmatpush1.msra.mxu0 0.0
  %1259 = vmatprep.subr.mxu0 0.0
  %1260 = vmatpush1.msra.mxu0 0.0
  %1261 = vmatprep.subr.mxu0 0.0
  %1262 = vmatpush1.msra.mxu0 0.0
  %1263 = vmatprep.subr.mxu0 0.0
  %1264 = vmatpush1.msra.mxu0 0.0
  %1265 = vmatprep.subr.mxu0 0.0
  %1266 = vmatpush1.msra.mxu0 0.0
  %1267 = vmatprep.subr.mxu0 0.0
  %1268 = vmatpush1.msra.mxu0 0.0
  %1269 = vmatprep.subr.mxu0 0.0
  %1270 = vmatpush1.msra.mxu0 0.0
  %1271 = vmatprep.subr.mxu0 0.0
  %1272 = vmatpush1.msra.mxu0 0.0
  %1273 = vmatprep.subr.mxu0 0.0
  %1274 = vmatpush1.msra.mxu0 0.0
  %1275 = vmatprep.subr.mxu0 0.0
  %1276 = vmatpush1.msra.mxu0 0.0
  %1277 = vmatprep.subr.mxu0 0.0
  %1278 = vmatpush1.msra.mxu0 0.0
  %1279 = vmatprep.subr.mxu0 0.0
  %1280 = vmatpush1.msra.mxu0 0.0
  %1281 = vmatprep.subr.mxu0 0.0
  %1282 = vmatpush1.msra.mxu0 0.0
  %1283 = vmatprep.mubr.f32.mxu0 0.0
  %1284 = vmatmul.mubr.f32.gmra.mrb[0].mxu0 %v1217
  %v1285 = vpop.f32.mrb[0].mxu0
  %v1286 = vadd.f32 0.0, %v1285
  %v1287 = vpop.f32.mrb[0].mxu0
  %1288 = vdwg.mxu0
  %v1290 = vsel %vm1215, %v1205, 0
  %1292 = vmatprep.subr.mxu0 0.0
  %1293 = vmatpush1.msra.mxu0 %v1206
  %1294 = vmatprep.subr.mxu0 0.0
  %1295 = vmatpush1.msra.mxu0 %v1207
  %1296 = vmatprep.subr.mxu0 0.0
  %1297 = vmatpush1.msra.mxu0 %v1208
  %1298 = vmatprep.subr.mxu0 0.0
  %1299 = vmatpush1.msra.mxu0 %v1209
  %1300 = vmatprep.subr.mxu0 0.0
  %1301 = vmatpush1.msra.mxu0 0.0
  %1302 = vmatprep.subr.mxu0 0.0
  %1303 = vmatpush1.msra.mxu0 0.0
  %1304 = vmatprep.subr.mxu0 0.0
  %1305 = vmatpush1.msra.mxu0 0.0
  %1306 = vmatprep.subr.mxu0 0.0
  %1307 = vmatpush1.msra.mxu0 0.0
  %1308 = vmatprep.subr.mxu0 0.0
  %1309 = vmatpush1.msra.mxu0 0.0
  %1310 = vmatprep.subr.mxu0 0.0
  %1311 = vmatpush1.msra.mxu0 0.0
  %1312 = vmatprep.subr.mxu0 0.0
  %1313 = vmatpush1.msra.mxu0 0.0
  %1314 = vmatprep.subr.mxu0 0.0
  %1315 = vmatpush1.msra.mxu0 0.0
  %1316 = vmatprep.subr.mxu0 0.0
  %1317 = vmatpush1.msra.mxu0 0.0
  %1318 = vmatprep.subr.mxu0 0.0
  %1319 = vmatpush1.msra.mxu0 0.0
  %1320 = vmatprep.subr.mxu0 0.0
  %1321 = vmatpush1.msra.mxu0 0.0
  %1322 = vmatprep.subr.mxu0 0.0
  %1323 = vmatpush1.msra.mxu0 0.0
  %1324 = vmatprep.subr.mxu0 0.0
  %1325 = vmatpush1.msra.mxu0 0.0
  %1326 = vmatprep.subr.mxu0 0.0
  %1327 = vmatpush1.msra.mxu0 0.0
  %1328 = vmatprep.subr.mxu0 0.0
  %1329 = vmatpush1.msra.mxu0 0.0
  %1330 = vmatprep.subr.mxu0 0.0
  %1331 = vmatpush1.msra.mxu0 0.0
  %1332 = vmatprep.subr.mxu0 0.0
  %1333 = vmatpush1.msra.mxu0 0.0
  %1334 = vmatprep.subr.mxu0 0.0
  %1335 = vmatpush1.msra.mxu0 0.0
  %1336 = vmatprep.subr.mxu0 0.0
  %1337 = vmatpush1.msra.mxu0 0.0
  %1338 = vmatprep.subr.mxu0 0.0
  %1339 = vmatpush1.msra.mxu0 0.0
  %1340 = vmatprep.subr.mxu0 0.0
  %1341 = vmatpush1.msra.mxu0 0.0
  %1342 = vmatprep.subr.mxu0 0.0
  %1343 = vmatpush1.msra.mxu0 0.0
  %1344 = vmatprep.subr.mxu0 0.0
  %1345 = vmatpush1.msra.mxu0 0.0
  %1346 = vmatprep.subr.mxu0 0.0
  %1347 = vmatpush1.msra.mxu0 0.0
  %1348 = vmatprep.subr.mxu0 0.0
  %1349 = vmatpush1.msra.mxu0 0.0
  %1350 = vmatprep.subr.mxu0 0.0
  %1351 = vmatpush1.msra.mxu0 0.0
  %1352 = vmatprep.subr.mxu0 0.0
  %1353 = vmatpush1.msra.mxu0 0.0
  %1354 = vmatprep.subr.mxu0 0.0
  %1355 = vmatpush1.msra.mxu0 0.0
  %1356 = vmatprep.mubr.f32.mxu0 0.0
  %1357 = vmatmul.mubr.f32.gmra.mrb[0].mxu0 %v1290
  %v1358 = vpop.f32.mrb[0].mxu0
  %v1359 = vadd.f32 %v1286, %v1358
  %v1360 = vpop.f32.mrb[0].mxu0
  %1361 = vdwg.mxu0
  %v1362 = vld [vmem:[%s6] sm:$0x1]
  %v1364 = vlaneseq
  %v1365 = vshrl.u32 %v1364, 7
  %v1366 = vsub.s32 0, %v1365
  %v1367 = vrot.slane %v1362, %v1366
  %v1369 = vadd.f32 %v1359, %v1367
  %1370 = vst [vmem:[%s7] sm:$0xff] %v1369
  // Predicated region
  $region30: #{bilstm_dependency_parser.1} parent=0 // pred_check
    _
  $region31: #{bilstm_dependency_parser.1} parent=0 // pred_check_branch
    %1372 = sbr.rel (0) target = $region33
  $region32: #{bilstm_dependency_parser.1} parent=0 // pred_region
    _
  $region33: #{bilstm_dependency_parser.1} parent=0 // pred_fallthru
    _
  // Predicated region
  $region34: #{bilstm_dependency_parser.1} parent=0 // pred_check
    _
  $region35: #{bilstm_dependency_parser.1} parent=0 // pred_check_branch
    %1374 = sbr.rel (0) target = $region37
  $region36: #{bilstm_dependency_parser.1} parent=0 // pred_region
    _
  $region37: #{bilstm_dependency_parser.1} parent=0 // pred_fallthru
    _

</llo_original>
